<compile_context>
chip_gen: v7x
topology: tpu7x:2x2x1
jax: 0.10.0
libtpu: 0.0.40
codegen_flags: <defaults>
</compile_context>

<pallas_src>
import jax
import jax.numpy as jnp
import numpy as np
from jax.experimental import pallas as pl
from jax.experimental.pallas import tpu as pltpu

# ---- Config.param['LSTM'] (synthetic, small) --------------------------------
HIDDEN = 32          # hidden_size
EMBED = 32           # embed_dim (chosen == hidden_size so layer weights stack)
N_LAYERS = 2         # n_layers
SEQ_LEN = 8          # sentence_max_length
CLASS_NUM = 3
LABEL_NUM = 4
OUT_DIM = CLASS_NUM * LABEL_NUM
OUT_PAD = 128        # lane-dense padded fc output width
BATCH = 2


def lstm_kernel(x_ref, w_ref, b_ref, wfc_ref, bfc_ref, out_ref):
    """Whole-sequence LSTM forward in one invocation.

    x_ref  : (T, B, E)        time-major input
    w_ref  : (L, 2H, 4H)      fused gate weights  [Wh@Wa_top ; Wx@Wa_bot]
    b_ref  : (L, 1, 4H)       fused gate biases
    wfc_ref: (T*H, OUT_PAD)   zero-padded fc weight
    bfc_ref: (1, OUT_PAD)     zero-padded fc bias
    out_ref: (B, OUT_PAD)     lane-dense output
    """
    B = x_ref.shape[1]

    # Hoist per-layer weight loads and bias broadcasts out of the time loop.
    w = [w_ref[layer] for layer in range(N_LAYERS)]                       # (2H, 4H)
    b = [jnp.broadcast_to(b_ref[layer], (B, 4 * HIDDEN)) for layer in range(N_LAYERS)]

    h = [jnp.zeros((B, HIDDEN), jnp.float32) for _ in range(N_LAYERS)]
    c = [jnp.zeros((B, HIDDEN), jnp.float32) for _ in range(N_LAYERS)]

    hs = []
    for t in range(SEQ_LEN):                         # fully unrolled (T=8)
        inp = x_ref[t]                               # (B, E)
        for layer in range(N_LAYERS):
            # One fused matmul per layer-step: [h | x](B,2H) @ W'(2H,4H).
            hx = jnp.concatenate([h[layer], inp], axis=-1)                # (B, 2H)
            act = jnp.dot(hx, w[layer],
                          preferred_element_type=jnp.float32) + b[layer]  # (B, 4H)
            # Single full-vreg sigmoid; tanh only on the g-gate lanes.
            sig = jax.nn.sigmoid(act)
            i_g = sig[:, 0 * HIDDEN:1 * HIDDEN]
            f_g = sig[:, 1 * HIDDEN:2 * HIDDEN]
            o_g = sig[:, 3 * HIDDEN:4 * HIDDEN]
            g_t = jnp.tanh(act[:, 2 * HIDDEN:3 * HIDDEN])
            c[layer] = f_g * c[layer] + i_g * g_t
            h[layer] = o_g * jnp.tanh(c[layer])
            inp = h[layer]                           # dropout == identity (eval)
        hs.append(h[-1])

    # Single fc matmul over the whole sequence: (B, T*H) @ (T*H, OUT_PAD).
    seq = jnp.concatenate(hs, axis=-1)               # (B, T*H)
    out_ref[...] = (jnp.dot(seq, wfc_ref[...],
                            preferred_element_type=jnp.float32) + bfc_ref[...])


def lstm_forward(x, params):
    """x: (B, T, E) float32 -> (B, class_num, label_num)."""
    B = x.shape[0]
    x_tm = jnp.transpose(x, (1, 0, 2)).astype(jnp.float32)      # (T, B, E) time-major

    # ---- Algebraic fusion of the 3-matmul gate chain (exact) ----------------
    # act = [h@Wh+bh | x@Wx+bx] @ Wa + ba
    #     = h @ (Wh@Wa_top) + x @ (Wx@Wa_bot) + (bh@Wa_top + bx@Wa_bot + ba)
    wa_h = params["wa"][:, :4 * HIDDEN, :]                      # (L, 4H, 4H)
    wa_x = params["wa"][:, 4 * HIDDEN:, :]                      # (L, 4H, 4H)
    wh_f = jnp.einsum("lij,ljk->lik", params["wh"], wa_h)       # (L, H, 4H)
    wx_f = jnp.einsum("lij,ljk->lik", params["wx"], wa_x)       # (L, E, 4H)
    w_fused = jnp.concatenate([wh_f, wx_f], axis=1)             # (L, 2H, 4H)
    b_fused = (jnp.einsum("lij,ljk->lik", params["bh"], wa_h)
               + jnp.einsum("lij,ljk->lik", params["bx"], wa_x)
               + params["ba"])                                  # (L, 1, 4H)

    # ---- Lane-dense fc: zero-pad OUT_DIM=12 -> 128 lanes ---------------------
    wfc_pad = jnp.zeros((SEQ_LEN * HIDDEN, OUT_PAD), jnp.float32)
    wfc_pad = wfc_pad.at[:, :OUT_DIM].set(params["wfc"])
    bfc_pad = jnp.zeros((1, OUT_PAD), jnp.float32)
    bfc_pad = bfc_pad.at[:, :OUT_DIM].set(params["bfc"])

    vmem = pl.BlockSpec(memory_space=pltpu.MemorySpace.VMEM)
    out = pl.pallas_call(
        lstm_kernel,
        out_shape=jax.ShapeDtypeStruct((B, OUT_PAD), jnp.float32),
        in_specs=[vmem, vmem, vmem, vmem, vmem],    # everything fully VMEM-resident
        out_specs=vmem,
    )(x_tm, w_fused, b_fused, wfc_pad, bfc_pad)

    return out[:, :OUT_DIM].reshape(-1, CLASS_NUM, LABEL_NUM)


def lstm_reference(x, params):
    """Pure-JAX reference mirroring the PyTorch forward (eval mode, unfused)."""
    B = x.shape[0]
    x = x.astype(jnp.float32)
    h = [jnp.zeros((B, HIDDEN), jnp.float32) for _ in range(N_LAYERS)]
    c = [jnp.zeros((B, HIDDEN), jnp.float32) for _ in range(N_LAYERS)]
    outs = []
    for t in range(SEQ_LEN):
        inp = x[:, t, :]
        for layer in range(N_LAYERS):
            gh = h[layer] @ params["wh"][layer] + params["bh"][layer][0]
            gx = inp @ params["wx"][layer] + params["bx"][layer][0]
            gates = jnp.concatenate([gh, gx], axis=-1)
            act = gates @ params["wa"][layer] + params["ba"][layer][0]
            i_g, f_g, g_g, o_g = jnp.split(act, 4, axis=-1)
            c[layer] = jax.nn.sigmoid(f_g) * c[layer] + jax.nn.sigmoid(i_g) * jnp.tanh(g_g)
            h[layer] = jax.nn.sigmoid(o_g) * jnp.tanh(c[layer])
            inp = h[layer]
        outs.append(h[-1])
    seq = jnp.stack(outs, axis=1).reshape(B, -1)                # (B, T*H)
    out = seq @ params["wfc"] + params["bfc"][0]
    return out.reshape(-1, CLASS_NUM, LABEL_NUM)


def init_params(key):
    ks = jax.random.split(key, 10)
    scale = 0.1
    return {
        # Linear weights stored as (in_features, out_features)
        "wh": scale * jax.random.normal(ks[0], (N_LAYERS, HIDDEN, 4 * HIDDEN), jnp.float32),
        "bh": scale * jax.random.normal(ks[1], (N_LAYERS, 1, 4 * HIDDEN), jnp.float32),
        "wx": scale * jax.random.normal(ks[2], (N_LAYERS, EMBED, 4 * HIDDEN), jnp.float32),
        "bx": scale * jax.random.normal(ks[3], (N_LAYERS, 1, 4 * HIDDEN), jnp.float32),
        "wa": scale * jax.random.normal(ks[4], (N_LAYERS, 8 * HIDDEN, 4 * HIDDEN), jnp.float32),
        "ba": scale * jax.random.normal(ks[5], (N_LAYERS, 1, 4 * HIDDEN), jnp.float32),
        "wfc": scale * jax.random.normal(ks[6], (SEQ_LEN * HIDDEN, OUT_DIM), jnp.float32),
        "bfc": scale * jax.random.normal(ks[7], (1, OUT_DIM), jnp.float32),
    }


if __name__ == "__main__":
    key = jax.random.PRNGKey(0)
    pkey, xkey = jax.random.split(key)
    params = init_params(pkey)
    x = jax.random.normal(xkey, (BATCH, SEQ_LEN, EMBED), jnp.float32)

    out = jax.block_until_ready(lstm_forward(x, params))
    ref = jax.block_until_ready(lstm_reference(x, params))

    assert out.shape == (BATCH, CLASS_NUM, LABEL_NUM), out.shape
    np.testing.assert_allclose(np.asarray(out), np.asarray(ref), atol=1e-4, rtol=1e-4)
    print("KERNEL_OK")
</pallas_src>

<mosaic_0001>
module attributes {stable_mosaic.version = 11 : i64} {
  func.func @lstm_kernel(%arg0: memref<8x2x32xf32, #tpu.memory_space<vmem>>, %arg1: memref<2x64x128xf32, #tpu.memory_space<vmem>>, %arg2: memref<2x1x128xf32, #tpu.memory_space<vmem>>, %arg3: memref<256x128xf32, #tpu.memory_space<vmem>>, %arg4: memref<1x128xf32, #tpu.memory_space<vmem>>, %arg5: memref<2x128xf32, #tpu.memory_space<vmem>>) attributes {dimension_semantics = [], scalar_prefetch = 0 : i64, scratch_operands = 0 : i64, tpu.core_type = #tpu.core_type<tc>} {
    %c0 = arith.constant 0 : index
    %c0_0 = arith.constant 0 : index
    %c0_1 = arith.constant 0 : index
    %0 = vector.load %arg1[%c0, %c0_0, %c0_1] : memref<2x64x128xf32, #tpu.memory_space<vmem>>, vector<1x64x128xf32>
    %1 = vector.shape_cast %0 : vector<1x64x128xf32> to vector<64x128xf32>
    %c1 = arith.constant 1 : index
    %c0_2 = arith.constant 0 : index
    %c0_3 = arith.constant 0 : index
    %2 = vector.load %arg1[%c1, %c0_2, %c0_3] : memref<2x64x128xf32, #tpu.memory_space<vmem>>, vector<1x64x128xf32>
    %3 = vector.shape_cast %2 : vector<1x64x128xf32> to vector<64x128xf32>
    %c0_4 = arith.constant 0 : index
    %c0_5 = arith.constant 0 : index
    %c0_6 = arith.constant 0 : index
    %4 = vector.load %arg2[%c0_4, %c0_5, %c0_6] : memref<2x1x128xf32, #tpu.memory_space<vmem>>, vector<1x1x128xf32>
    %5 = vector.shape_cast %4 : vector<1x1x128xf32> to vector<1x128xf32>
    %6 = vector.shape_cast %5 : vector<1x128xf32> to vector<1x128xf32>
    %7 = vector.broadcast %6 : vector<1x128xf32> to vector<2x128xf32>
    %c1_7 = arith.constant 1 : index
    %c0_8 = arith.constant 0 : index
    %c0_9 = arith.constant 0 : index
    %8 = vector.load %arg2[%c1_7, %c0_8, %c0_9] : memref<2x1x128xf32, #tpu.memory_space<vmem>>, vector<1x1x128xf32>
    %9 = vector.shape_cast %8 : vector<1x1x128xf32> to vector<1x128xf32>
    %10 = vector.shape_cast %9 : vector<1x128xf32> to vector<1x128xf32>
    %11 = vector.broadcast %10 : vector<1x128xf32> to vector<2x128xf32>
    %cst = arith.constant 0.000000e+00 : f32
    %12 = vector.broadcast %cst : f32 to vector<2x32xf32>
    %cst_10 = arith.constant 0.000000e+00 : f32
    %13 = vector.broadcast %cst_10 : f32 to vector<2x32xf32>
    %cst_11 = arith.constant 0.000000e+00 : f32
    %14 = vector.broadcast %cst_11 : f32 to vector<2x32xf32>
    %cst_12 = arith.constant 0.000000e+00 : f32
    %15 = vector.broadcast %cst_12 : f32 to vector<2x32xf32>
    %c0_13 = arith.constant 0 : index
    %c0_14 = arith.constant 0 : index
    %c0_15 = arith.constant 0 : index
    %16 = vector.load %arg0[%c0_13, %c0_14, %c0_15] : memref<8x2x32xf32, #tpu.memory_space<vmem>>, vector<1x2x32xf32>
    %17 = vector.shape_cast %16 : vector<1x2x32xf32> to vector<2x32xf32>
    %18 = tpu.concatenate %12, %17 in 1 : vector<2x32xf32>, vector<2x32xf32> -> vector<2x64xf32>
    %cst_16 = arith.constant dense<0.000000e+00> : vector<2x128xf32>
    %19 = tpu.matmul %18, %1, %cst_16 {dimension_numbers = #tpu.dot_dimension_numbers<[1], [0], [0], [1], [0, 0, 1, 1], [], []>} : vector<2x64xf32>, vector<64x128xf32>, vector<2x128xf32> -> vector<2x128xf32>
    %20 = arith.addf %19, %7 : vector<2x128xf32>
    %21 = arith.negf %20 : vector<2x128xf32>
    %22 = math.exp %21 : vector<2x128xf32>
    %cst_17 = arith.constant 1.000000e+00 : f32
    %23 = vector.broadcast %cst_17 : f32 to vector<2x128xf32>
    %24 = arith.addf %23, %22 : vector<2x128xf32>
    %25 = arith.divf %23, %24 : vector<2x128xf32>
    %26 = vector.extract_strided_slice %25 {offsets = [0, 0], sizes = [2, 32], strides = [1, 1]} : vector<2x128xf32> to vector<2x32xf32>
    %27 = vector.extract_strided_slice %25 {offsets = [0, 32], sizes = [2, 32], strides = [1, 1]} : vector<2x128xf32> to vector<2x32xf32>
    %28 = vector.extract_strided_slice %25 {offsets = [0, 96], sizes = [2, 32], strides = [1, 1]} : vector<2x128xf32> to vector<2x32xf32>
    %29 = vector.extract_strided_slice %20 {offsets = [0, 64], sizes = [2, 32], strides = [1, 1]} : vector<2x128xf32> to vector<2x32xf32>
    %30 = math.tanh %29 : vector<2x32xf32>
    %31 = arith.mulf %27, %14 : vector<2x32xf32>
    %32 = arith.mulf %26, %30 : vector<2x32xf32>
    %33 = arith.addf %31, %32 : vector<2x32xf32>
    %34 = math.tanh %33 : vector<2x32xf32>
    %35 = arith.mulf %28, %34 : vector<2x32xf32>
    %36 = tpu.concatenate %13, %35 in 1 : vector<2x32xf32>, vector<2x32xf32> -> vector<2x64xf32>
    %cst_18 = arith.constant dense<0.000000e+00> : vector<2x128xf32>
    %37 = tpu.matmul %36, %3, %cst_18 {dimension_numbers = #tpu.dot_dimension_numbers<[1], [0], [0], [1], [0, 0, 1, 1], [], []>} : vector<2x64xf32>, vector<64x128xf32>, vector<2x128xf32> -> vector<2x128xf32>
    %38 = arith.addf %37, %11 : vector<2x128xf32>
    %39 = arith.negf %38 : vector<2x128xf32>
    %40 = math.exp %39 : vector<2x128xf32>
    %cst_19 = arith.constant 1.000000e+00 : f32
    %41 = vector.broadcast %cst_19 : f32 to vector<2x128xf32>
    %42 = arith.addf %41, %40 : vector<2x128xf32>
    %43 = arith.divf %41, %42 : vector<2x128xf32>
    %44 = vector.extract_strided_slice %43 {offsets = [0, 0], sizes = [2, 32], strides = [1, 1]} : vector<2x128xf32> to vector<2x32xf32>
    %45 = vector.extract_strided_slice %43 {offsets = [0, 32], sizes = [2, 32], strides = [1, 1]} : vector<2x128xf32> to vector<2x32xf32>
    %46 = vector.extract_strided_slice %43 {offsets = [0, 96], sizes = [2, 32], strides = [1, 1]} : vector<2x128xf32> to vector<2x32xf32>
    %47 = vector.extract_strided_slice %38 {offsets = [0, 64], sizes = [2, 32], strides = [1, 1]} : vector<2x128xf32> to vector<2x32xf32>
    %48 = math.tanh %47 : vector<2x32xf32>
    %49 = arith.mulf %45, %15 : vector<2x32xf32>
    %50 = arith.mulf %44, %48 : vector<2x32xf32>
    %51 = arith.addf %49, %50 : vector<2x32xf32>
    %52 = math.tanh %51 : vector<2x32xf32>
    %53 = arith.mulf %46, %52 : vector<2x32xf32>
    %c1_20 = arith.constant 1 : index
    %c0_21 = arith.constant 0 : index
    %c0_22 = arith.constant 0 : index
    %54 = vector.load %arg0[%c1_20, %c0_21, %c0_22] : memref<8x2x32xf32, #tpu.memory_space<vmem>>, vector<1x2x32xf32>
    %55 = vector.shape_cast %54 : vector<1x2x32xf32> to vector<2x32xf32>
    %56 = tpu.concatenate %35, %55 in 1 : vector<2x32xf32>, vector<2x32xf32> -> vector<2x64xf32>
    %cst_23 = arith.constant dense<0.000000e+00> : vector<2x128xf32>
    %57 = tpu.matmul %56, %1, %cst_23 {dimension_numbers = #tpu.dot_dimension_numbers<[1], [0], [0], [1], [0, 0, 1, 1], [], []>} : vector<2x64xf32>, vector<64x128xf32>, vector<2x128xf32> -> vector<2x128xf32>
    %58 = arith.addf %57, %7 : vector<2x128xf32>
    %59 = arith.negf %58 : vector<2x128xf32>
    %60 = math.exp %59 : vector<2x128xf32>
    %cst_24 = arith.constant 1.000000e+00 : f32
    %61 = vector.broadcast %cst_24 : f32 to vector<2x128xf32>
    %62 = arith.addf %61, %60 : vector<2x128xf32>
    %63 = arith.divf %61, %62 : vector<2x128xf32>
    %64 = vector.extract_strided_slice %63 {offsets = [0, 0], sizes = [2, 32], strides = [1, 1]} : vector<2x128xf32> to vector<2x32xf32>
    %65 = vector.extract_strided_slice %63 {offsets = [0, 32], sizes = [2, 32], strides = [1, 1]} : vector<2x128xf32> to vector<2x32xf32>
    %66 = vector.extract_strided_slice %63 {offsets = [0, 96], sizes = [2, 32], strides = [1, 1]} : vector<2x128xf32> to vector<2x32xf32>
    %67 = vector.extract_strided_slice %58 {offsets = [0, 64], sizes = [2, 32], strides = [1, 1]} : vector<2x128xf32> to vector<2x32xf32>
    %68 = math.tanh %67 : vector<2x32xf32>
    %69 = arith.mulf %65, %33 : vector<2x32xf32>
    %70 = arith.mulf %64, %68 : vector<2x32xf32>
    %71 = arith.addf %69, %70 : vector<2x32xf32>
    %72 = math.tanh %71 : vector<2x32xf32>
    %73 = arith.mulf %66, %72 : vector<2x32xf32>
    %74 = tpu.concatenate %53, %73 in 1 : vector<2x32xf32>, vector<2x32xf32> -> vector<2x64xf32>
    %cst_25 = arith.constant dense<0.000000e+00> : vector<2x128xf32>
    %75 = tpu.matmul %74, %3, %cst_25 {dimension_numbers = #tpu.dot_dimension_numbers<[1], [0], [0], [1], [0, 0, 1, 1], [], []>} : vector<2x64xf32>, vector<64x128xf32>, vector<2x128xf32> -> vector<2x128xf32>
    %76 = arith.addf %75, %11 : vector<2x128xf32>
    %77 = arith.negf %76 : vector<2x128xf32>
    %78 = math.exp %77 : vector<2x128xf32>
    %cst_26 = arith.constant 1.000000e+00 : f32
    %79 = vector.broadcast %cst_26 : f32 to vector<2x128xf32>
    %80 = arith.addf %79, %78 : vector<2x128xf32>
    %81 = arith.divf %79, %80 : vector<2x128xf32>
    %82 = vector.extract_strided_slice %81 {offsets = [0, 0], sizes = [2, 32], strides = [1, 1]} : vector<2x128xf32> to vector<2x32xf32>
    %83 = vector.extract_strided_slice %81 {offsets = [0, 32], sizes = [2, 32], strides = [1, 1]} : vector<2x128xf32> to vector<2x32xf32>
    %84 = vector.extract_strided_slice %81 {offsets = [0, 96], sizes = [2, 32], strides = [1, 1]} : vector<2x128xf32> to vector<2x32xf32>
    %85 = vector.extract_strided_slice %76 {offsets = [0, 64], sizes = [2, 32], strides = [1, 1]} : vector<2x128xf32> to vector<2x32xf32>
    %86 = math.tanh %85 : vector<2x32xf32>
    %87 = arith.mulf %83, %51 : vector<2x32xf32>
    %88 = arith.mulf %82, %86 : vector<2x32xf32>
    %89 = arith.addf %87, %88 : vector<2x32xf32>
    %90 = math.tanh %89 : vector<2x32xf32>
    %91 = arith.mulf %84, %90 : vector<2x32xf32>
    %c2 = arith.constant 2 : index
    %c0_27 = arith.constant 0 : index
    %c0_28 = arith.constant 0 : index
    %92 = vector.load %arg0[%c2, %c0_27, %c0_28] : memref<8x2x32xf32, #tpu.memory_space<vmem>>, vector<1x2x32xf32>
    %93 = vector.shape_cast %92 : vector<1x2x32xf32> to vector<2x32xf32>
    %94 = tpu.concatenate %73, %93 in 1 : vector<2x32xf32>, vector<2x32xf32> -> vector<2x64xf32>
    %cst_29 = arith.constant dense<0.000000e+00> : vector<2x128xf32>
    %95 = tpu.matmul %94, %1, %cst_29 {dimension_numbers = #tpu.dot_dimension_numbers<[1], [0], [0], [1], [0, 0, 1, 1], [], []>} : vector<2x64xf32>, vector<64x128xf32>, vector<2x128xf32> -> vector<2x128xf32>
    %96 = arith.addf %95, %7 : vector<2x128xf32>
    %97 = arith.negf %96 : vector<2x128xf32>
    %98 = math.exp %97 : vector<2x128xf32>
    %cst_30 = arith.constant 1.000000e+00 : f32
    %99 = vector.broadcast %cst_30 : f32 to vector<2x128xf32>
    %100 = arith.addf %99, %98 : vector<2x128xf32>
    %101 = arith.divf %99, %100 : vector<2x128xf32>
    %102 = vector.extract_strided_slice %101 {offsets = [0, 0], sizes = [2, 32], strides = [1, 1]} : vector<2x128xf32> to vector<2x32xf32>
    %103 = vector.extract_strided_slice %101 {offsets = [0, 32], sizes = [2, 32], strides = [1, 1]} : vector<2x128xf32> to vector<2x32xf32>
    %104 = vector.extract_strided_slice %101 {offsets = [0, 96], sizes = [2, 32], strides = [1, 1]} : vector<2x128xf32> to vector<2x32xf32>
    %105 = vector.extract_strided_slice %96 {offsets = [0, 64], sizes = [2, 32], strides = [1, 1]} : vector<2x128xf32> to vector<2x32xf32>
    %106 = math.tanh %105 : vector<2x32xf32>
    %107 = arith.mulf %103, %71 : vector<2x32xf32>
    %108 = arith.mulf %102, %106 : vector<2x32xf32>
    %109 = arith.addf %107, %108 : vector<2x32xf32>
    %110 = math.tanh %109 : vector<2x32xf32>
    %111 = arith.mulf %104, %110 : vector<2x32xf32>
    %112 = tpu.concatenate %91, %111 in 1 : vector<2x32xf32>, vector<2x32xf32> -> vector<2x64xf32>
    %cst_31 = arith.constant dense<0.000000e+00> : vector<2x128xf32>
    %113 = tpu.matmul %112, %3, %cst_31 {dimension_numbers = #tpu.dot_dimension_numbers<[1], [0], [0], [1], [0, 0, 1, 1], [], []>} : vector<2x64xf32>, vector<64x128xf32>, vector<2x128xf32> -> vector<2x128xf32>
    %114 = arith.addf %113, %11 : vector<2x128xf32>
    %115 = arith.negf %114 : vector<2x128xf32>
    %116 = math.exp %115 : vector<2x128xf32>
    %cst_32 = arith.constant 1.000000e+00 : f32
    %117 = vector.broadcast %cst_32 : f32 to vector<2x128xf32>
    %118 = arith.addf %117, %116 : vector<2x128xf32>
    %119 = arith.divf %117, %118 : vector<2x128xf32>
    %120 = vector.extract_strided_slice %119 {offsets = [0, 0], sizes = [2, 32], strides = [1, 1]} : vector<2x128xf32> to vector<2x32xf32>
    %121 = vector.extract_strided_slice %119 {offsets = [0, 32], sizes = [2, 32], strides = [1, 1]} : vector<2x128xf32> to vector<2x32xf32>
    %122 = vector.extract_strided_slice %119 {offsets = [0, 96], sizes = [2, 32], strides = [1, 1]} : vector<2x128xf32> to vector<2x32xf32>
    %123 = vector.extract_strided_slice %114 {offsets = [0, 64], sizes = [2, 32], strides = [1, 1]} : vector<2x128xf32> to vector<2x32xf32>
    %124 = math.tanh %123 : vector<2x32xf32>
    %125 = arith.mulf %121, %89 : vector<2x32xf32>
    %126 = arith.mulf %120, %124 : vector<2x32xf32>
    %127 = arith.addf %125, %126 : vector<2x32xf32>
    %128 = math.tanh %127 : vector<2x32xf32>
    %129 = arith.mulf %122, %128 : vector<2x32xf32>
    %c3 = arith.constant 3 : index
    %c0_33 = arith.constant 0 : index
    %c0_34 = arith.constant 0 : index
    %130 = vector.load %arg0[%c3, %c0_33, %c0_34] : memref<8x2x32xf32, #tpu.memory_space<vmem>>, vector<1x2x32xf32>
    %131 = vector.shape_cast %130 : vector<1x2x32xf32> to vector<2x32xf32>
    %132 = tpu.concatenate %111, %131 in 1 : vector<2x32xf32>, vector<2x32xf32> -> vector<2x64xf32>
    %cst_35 = arith.constant dense<0.000000e+00> : vector<2x128xf32>
    %133 = tpu.matmul %132, %1, %cst_35 {dimension_numbers = #tpu.dot_dimension_numbers<[1], [0], [0], [1], [0, 0, 1, 1], [], []>} : vector<2x64xf32>, vector<64x128xf32>, vector<2x128xf32> -> vector<2x128xf32>
    %134 = arith.addf %133, %7 : vector<2x128xf32>
    %135 = arith.negf %134 : vector<2x128xf32>
    %136 = math.exp %135 : vector<2x128xf32>
    %cst_36 = arith.constant 1.000000e+00 : f32
    %137 = vector.broadcast %cst_36 : f32 to vector<2x128xf32>
    %138 = arith.addf %137, %136 : vector<2x128xf32>
    %139 = arith.divf %137, %138 : vector<2x128xf32>
    %140 = vector.extract_strided_slice %139 {offsets = [0, 0], sizes = [2, 32], strides = [1, 1]} : vector<2x128xf32> to vector<2x32xf32>
    %141 = vector.extract_strided_slice %139 {offsets = [0, 32], sizes = [2, 32], strides = [1, 1]} : vector<2x128xf32> to vector<2x32xf32>
    %142 = vector.extract_strided_slice %139 {offsets = [0, 96], sizes = [2, 32], strides = [1, 1]} : vector<2x128xf32> to vector<2x32xf32>
    %143 = vector.extract_strided_slice %134 {offsets = [0, 64], sizes = [2, 32], strides = [1, 1]} : vector<2x128xf32> to vector<2x32xf32>
    %144 = math.tanh %143 : vector<2x32xf32>
    %145 = arith.mulf %141, %109 : vector<2x32xf32>
    %146 = arith.mulf %140, %144 : vector<2x32xf32>
    %147 = arith.addf %145, %146 : vector<2x32xf32>
    %148 = math.tanh %147 : vector<2x32xf32>
    %149 = arith.mulf %142, %148 : vector<2x32xf32>
    %150 = tpu.concatenate %129, %149 in 1 : vector<2x32xf32>, vector<2x32xf32> -> vector<2x64xf32>
    %cst_37 = arith.constant dense<0.000000e+00> : vector<2x128xf32>
    %151 = tpu.matmul %150, %3, %cst_37 {dimension_numbers = #tpu.dot_dimension_numbers<[1], [0], [0], [1], [0, 0, 1, 1], [], []>} : vector<2x64xf32>, vector<64x128xf32>, vector<2x128xf32> -> vector<2x128xf32>
    %152 = arith.addf %151, %11 : vector<2x128xf32>
    %153 = arith.negf %152 : vector<2x128xf32>
    %154 = math.exp %153 : vector<2x128xf32>
    %cst_38 = arith.constant 1.000000e+00 : f32
    %155 = vector.broadcast %cst_38 : f32 to vector<2x128xf32>
    %156 = arith.addf %155, %154 : vector<2x128xf32>
    %157 = arith.divf %155, %156 : vector<2x128xf32>
    %158 = vector.extract_strided_slice %157 {offsets = [0, 0], sizes = [2, 32], strides = [1, 1]} : vector<2x128xf32> to vector<2x32xf32>
    %159 = vector.extract_strided_slice %157 {offsets = [0, 32], sizes = [2, 32], strides = [1, 1]} : vector<2x128xf32> to vector<2x32xf32>
    %160 = vector.extract_strided_slice %157 {offsets = [0, 96], sizes = [2, 32], strides = [1, 1]} : vector<2x128xf32> to vector<2x32xf32>
    %161 = vector.extract_strided_slice %152 {offsets = [0, 64], sizes = [2, 32], strides = [1, 1]} : vector<2x128xf32> to vector<2x32xf32>
    %162 = math.tanh %161 : vector<2x32xf32>
    %163 = arith.mulf %159, %127 : vector<2x32xf32>
    %164 = arith.mulf %158, %162 : vector<2x32xf32>
    %165 = arith.addf %163, %164 : vector<2x32xf32>
    %166 = math.tanh %165 : vector<2x32xf32>
    %167 = arith.mulf %160, %166 : vector<2x32xf32>
    %c4 = arith.constant 4 : index
    %c0_39 = arith.constant 0 : index
    %c0_40 = arith.constant 0 : index
    %168 = vector.load %arg0[%c4, %c0_39, %c0_40] : memref<8x2x32xf32, #tpu.memory_space<vmem>>, vector<1x2x32xf32>
    %169 = vector.shape_cast %168 : vector<1x2x32xf32> to vector<2x32xf32>
    %170 = tpu.concatenate %149, %169 in 1 : vector<2x32xf32>, vector<2x32xf32> -> vector<2x64xf32>
    %cst_41 = arith.constant dense<0.000000e+00> : vector<2x128xf32>
    %171 = tpu.matmul %170, %1, %cst_41 {dimension_numbers = #tpu.dot_dimension_numbers<[1], [0], [0], [1], [0, 0, 1, 1], [], []>} : vector<2x64xf32>, vector<64x128xf32>, vector<2x128xf32> -> vector<2x128xf32>
    %172 = arith.addf %171, %7 : vector<2x128xf32>
    %173 = arith.negf %172 : vector<2x128xf32>
    %174 = math.exp %173 : vector<2x128xf32>
    %cst_42 = arith.constant 1.000000e+00 : f32
    %175 = vector.broadcast %cst_42 : f32 to vector<2x128xf32>
    %176 = arith.addf %175, %174 : vector<2x128xf32>
    %177 = arith.divf %175, %176 : vector<2x128xf32>
    %178 = vector.extract_strided_slice %177 {offsets = [0, 0], sizes = [2, 32], strides = [1, 1]} : vector<2x128xf32> to vector<2x32xf32>
    %179 = vector.extract_strided_slice %177 {offsets = [0, 32], sizes = [2, 32], strides = [1, 1]} : vector<2x128xf32> to vector<2x32xf32>
    %180 = vector.extract_strided_slice %177 {offsets = [0, 96], sizes = [2, 32], strides = [1, 1]} : vector<2x128xf32> to vector<2x32xf32>
    %181 = vector.extract_strided_slice %172 {offsets = [0, 64], sizes = [2, 32], strides = [1, 1]} : vector<2x128xf32> to vector<2x32xf32>
    %182 = math.tanh %181 : vector<2x32xf32>
    %183 = arith.mulf %179, %147 : vector<2x32xf32>
    %184 = arith.mulf %178, %182 : vector<2x32xf32>
    %185 = arith.addf %183, %184 : vector<2x32xf32>
    %186 = math.tanh %185 : vector<2x32xf32>
    %187 = arith.mulf %180, %186 : vector<2x32xf32>
    %188 = tpu.concatenate %167, %187 in 1 : vector<2x32xf32>, vector<2x32xf32> -> vector<2x64xf32>
    %cst_43 = arith.constant dense<0.000000e+00> : vector<2x128xf32>
    %189 = tpu.matmul %188, %3, %cst_43 {dimension_numbers = #tpu.dot_dimension_numbers<[1], [0], [0], [1], [0, 0, 1, 1], [], []>} : vector<2x64xf32>, vector<64x128xf32>, vector<2x128xf32> -> vector<2x128xf32>
    %190 = arith.addf %189, %11 : vector<2x128xf32>
    %191 = arith.negf %190 : vector<2x128xf32>
    %192 = math.exp %191 : vector<2x128xf32>
    %cst_44 = arith.constant 1.000000e+00 : f32
    %193 = vector.broadcast %cst_44 : f32 to vector<2x128xf32>
    %194 = arith.addf %193, %192 : vector<2x128xf32>
    %195 = arith.divf %193, %194 : vector<2x128xf32>
    %196 = vector.extract_strided_slice %195 {offsets = [0, 0], sizes = [2, 32], strides = [1, 1]} : vector<2x128xf32> to vector<2x32xf32>
    %197 = vector.extract_strided_slice %195 {offsets = [0, 32], sizes = [2, 32], strides = [1, 1]} : vector<2x128xf32> to vector<2x32xf32>
    %198 = vector.extract_strided_slice %195 {offsets = [0, 96], sizes = [2, 32], strides = [1, 1]} : vector<2x128xf32> to vector<2x32xf32>
    %199 = vector.extract_strided_slice %190 {offsets = [0, 64], sizes = [2, 32], strides = [1, 1]} : vector<2x128xf32> to vector<2x32xf32>
    %200 = math.tanh %199 : vector<2x32xf32>
    %201 = arith.mulf %197, %165 : vector<2x32xf32>
    %202 = arith.mulf %196, %200 : vector<2x32xf32>
    %203 = arith.addf %201, %202 : vector<2x32xf32>
    %204 = math.tanh %203 : vector<2x32xf32>
    %205 = arith.mulf %198, %204 : vector<2x32xf32>
    %c5 = arith.constant 5 : index
    %c0_45 = arith.constant 0 : index
    %c0_46 = arith.constant 0 : index
    %206 = vector.load %arg0[%c5, %c0_45, %c0_46] : memref<8x2x32xf32, #tpu.memory_space<vmem>>, vector<1x2x32xf32>
    %207 = vector.shape_cast %206 : vector<1x2x32xf32> to vector<2x32xf32>
    %208 = tpu.concatenate %187, %207 in 1 : vector<2x32xf32>, vector<2x32xf32> -> vector<2x64xf32>
    %cst_47 = arith.constant dense<0.000000e+00> : vector<2x128xf32>
    %209 = tpu.matmul %208, %1, %cst_47 {dimension_numbers = #tpu.dot_dimension_numbers<[1], [0], [0], [1], [0, 0, 1, 1], [], []>} : vector<2x64xf32>, vector<64x128xf32>, vector<2x128xf32> -> vector<2x128xf32>
    %210 = arith.addf %209, %7 : vector<2x128xf32>
    %211 = arith.negf %210 : vector<2x128xf32>
    %212 = math.exp %211 : vector<2x128xf32>
    %cst_48 = arith.constant 1.000000e+00 : f32
    %213 = vector.broadcast %cst_48 : f32 to vector<2x128xf32>
    %214 = arith.addf %213, %212 : vector<2x128xf32>
    %215 = arith.divf %213, %214 : vector<2x128xf32>
    %216 = vector.extract_strided_slice %215 {offsets = [0, 0], sizes = [2, 32], strides = [1, 1]} : vector<2x128xf32> to vector<2x32xf32>
    %217 = vector.extract_strided_slice %215 {offsets = [0, 32], sizes = [2, 32], strides = [1, 1]} : vector<2x128xf32> to vector<2x32xf32>
    %218 = vector.extract_strided_slice %215 {offsets = [0, 96], sizes = [2, 32], strides = [1, 1]} : vector<2x128xf32> to vector<2x32xf32>
    %219 = vector.extract_strided_slice %210 {offsets = [0, 64], sizes = [2, 32], strides = [1, 1]} : vector<2x128xf32> to vector<2x32xf32>
    %220 = math.tanh %219 : vector<2x32xf32>
    %221 = arith.mulf %217, %185 : vector<2x32xf32>
    %222 = arith.mulf %216, %220 : vector<2x32xf32>
    %223 = arith.addf %221, %222 : vector<2x32xf32>
    %224 = math.tanh %223 : vector<2x32xf32>
    %225 = arith.mulf %218, %224 : vector<2x32xf32>
    %226 = tpu.concatenate %205, %225 in 1 : vector<2x32xf32>, vector<2x32xf32> -> vector<2x64xf32>
    %cst_49 = arith.constant dense<0.000000e+00> : vector<2x128xf32>
    %227 = tpu.matmul %226, %3, %cst_49 {dimension_numbers = #tpu.dot_dimension_numbers<[1], [0], [0], [1], [0, 0, 1, 1], [], []>} : vector<2x64xf32>, vector<64x128xf32>, vector<2x128xf32> -> vector<2x128xf32>
    %228 = arith.addf %227, %11 : vector<2x128xf32>
    %229 = arith.negf %228 : vector<2x128xf32>
    %230 = math.exp %229 : vector<2x128xf32>
    %cst_50 = arith.constant 1.000000e+00 : f32
    %231 = vector.broadcast %cst_50 : f32 to vector<2x128xf32>
    %232 = arith.addf %231, %230 : vector<2x128xf32>
    %233 = arith.divf %231, %232 : vector<2x128xf32>
    %234 = vector.extract_strided_slice %233 {offsets = [0, 0], sizes = [2, 32], strides = [1, 1]} : vector<2x128xf32> to vector<2x32xf32>
    %235 = vector.extract_strided_slice %233 {offsets = [0, 32], sizes = [2, 32], strides = [1, 1]} : vector<2x128xf32> to vector<2x32xf32>
    %236 = vector.extract_strided_slice %233 {offsets = [0, 96], sizes = [2, 32], strides = [1, 1]} : vector<2x128xf32> to vector<2x32xf32>
    %237 = vector.extract_strided_slice %228 {offsets = [0, 64], sizes = [2, 32], strides = [1, 1]} : vector<2x128xf32> to vector<2x32xf32>
    %238 = math.tanh %237 : vector<2x32xf32>
    %239 = arith.mulf %235, %203 : vector<2x32xf32>
    %240 = arith.mulf %234, %238 : vector<2x32xf32>
    %241 = arith.addf %239, %240 : vector<2x32xf32>
    %242 = math.tanh %241 : vector<2x32xf32>
    %243 = arith.mulf %236, %242 : vector<2x32xf32>
    %c6 = arith.constant 6 : index
    %c0_51 = arith.constant 0 : index
    %c0_52 = arith.constant 0 : index
    %244 = vector.load %arg0[%c6, %c0_51, %c0_52] : memref<8x2x32xf32, #tpu.memory_space<vmem>>, vector<1x2x32xf32>
    %245 = vector.shape_cast %244 : vector<1x2x32xf32> to vector<2x32xf32>
    %246 = tpu.concatenate %225, %245 in 1 : vector<2x32xf32>, vector<2x32xf32> -> vector<2x64xf32>
    %cst_53 = arith.constant dense<0.000000e+00> : vector<2x128xf32>
    %247 = tpu.matmul %246, %1, %cst_53 {dimension_numbers = #tpu.dot_dimension_numbers<[1], [0], [0], [1], [0, 0, 1, 1], [], []>} : vector<2x64xf32>, vector<64x128xf32>, vector<2x128xf32> -> vector<2x128xf32>
    %248 = arith.addf %247, %7 : vector<2x128xf32>
    %249 = arith.negf %248 : vector<2x128xf32>
    %250 = math.exp %249 : vector<2x128xf32>
    %cst_54 = arith.constant 1.000000e+00 : f32
    %251 = vector.broadcast %cst_54 : f32 to vector<2x128xf32>
    %252 = arith.addf %251, %250 : vector<2x128xf32>
    %253 = arith.divf %251, %252 : vector<2x128xf32>
    %254 = vector.extract_strided_slice %253 {offsets = [0, 0], sizes = [2, 32], strides = [1, 1]} : vector<2x128xf32> to vector<2x32xf32>
    %255 = vector.extract_strided_slice %253 {offsets = [0, 32], sizes = [2, 32], strides = [1, 1]} : vector<2x128xf32> to vector<2x32xf32>
    %256 = vector.extract_strided_slice %253 {offsets = [0, 96], sizes = [2, 32], strides = [1, 1]} : vector<2x128xf32> to vector<2x32xf32>
    %257 = vector.extract_strided_slice %248 {offsets = [0, 64], sizes = [2, 32], strides = [1, 1]} : vector<2x128xf32> to vector<2x32xf32>
    %258 = math.tanh %257 : vector<2x32xf32>
    %259 = arith.mulf %255, %223 : vector<2x32xf32>
    %260 = arith.mulf %254, %258 : vector<2x32xf32>
    %261 = arith.addf %259, %260 : vector<2x32xf32>
    %262 = math.tanh %261 : vector<2x32xf32>
    %263 = arith.mulf %256, %262 : vector<2x32xf32>
    %264 = tpu.concatenate %243, %263 in 1 : vector<2x32xf32>, vector<2x32xf32> -> vector<2x64xf32>
    %cst_55 = arith.constant dense<0.000000e+00> : vector<2x128xf32>
    %265 = tpu.matmul %264, %3, %cst_55 {dimension_numbers = #tpu.dot_dimension_numbers<[1], [0], [0], [1], [0, 0, 1, 1], [], []>} : vector<2x64xf32>, vector<64x128xf32>, vector<2x128xf32> -> vector<2x128xf32>
    %266 = arith.addf %265, %11 : vector<2x128xf32>
    %267 = arith.negf %266 : vector<2x128xf32>
    %268 = math.exp %267 : vector<2x128xf32>
    %cst_56 = arith.constant 1.000000e+00 : f32
    %269 = vector.broadcast %cst_56 : f32 to vector<2x128xf32>
    %270 = arith.addf %269, %268 : vector<2x128xf32>
    %271 = arith.divf %269, %270 : vector<2x128xf32>
    %272 = vector.extract_strided_slice %271 {offsets = [0, 0], sizes = [2, 32], strides = [1, 1]} : vector<2x128xf32> to vector<2x32xf32>
    %273 = vector.extract_strided_slice %271 {offsets = [0, 32], sizes = [2, 32], strides = [1, 1]} : vector<2x128xf32> to vector<2x32xf32>
    %274 = vector.extract_strided_slice %271 {offsets = [0, 96], sizes = [2, 32], strides = [1, 1]} : vector<2x128xf32> to vector<2x32xf32>
    %275 = vector.extract_strided_slice %266 {offsets = [0, 64], sizes = [2, 32], strides = [1, 1]} : vector<2x128xf32> to vector<2x32xf32>
    %276 = math.tanh %275 : vector<2x32xf32>
    %277 = arith.mulf %273, %241 : vector<2x32xf32>
    %278 = arith.mulf %272, %276 : vector<2x32xf32>
    %279 = arith.addf %277, %278 : vector<2x32xf32>
    %280 = math.tanh %279 : vector<2x32xf32>
    %281 = arith.mulf %274, %280 : vector<2x32xf32>
    %c7 = arith.constant 7 : index
    %c0_57 = arith.constant 0 : index
    %c0_58 = arith.constant 0 : index
    %282 = vector.load %arg0[%c7, %c0_57, %c0_58] : memref<8x2x32xf32, #tpu.memory_space<vmem>>, vector<1x2x32xf32>
    %283 = vector.shape_cast %282 : vector<1x2x32xf32> to vector<2x32xf32>
    %284 = tpu.concatenate %263, %283 in 1 : vector<2x32xf32>, vector<2x32xf32> -> vector<2x64xf32>
    %cst_59 = arith.constant dense<0.000000e+00> : vector<2x128xf32>
    %285 = tpu.matmul %284, %1, %cst_59 {dimension_numbers = #tpu.dot_dimension_numbers<[1], [0], [0], [1], [0, 0, 1, 1], [], []>} : vector<2x64xf32>, vector<64x128xf32>, vector<2x128xf32> -> vector<2x128xf32>
    %286 = arith.addf %285, %7 : vector<2x128xf32>
    %287 = arith.negf %286 : vector<2x128xf32>
    %288 = math.exp %287 : vector<2x128xf32>
    %cst_60 = arith.constant 1.000000e+00 : f32
    %289 = vector.broadcast %cst_60 : f32 to vector<2x128xf32>
    %290 = arith.addf %289, %288 : vector<2x128xf32>
    %291 = arith.divf %289, %290 : vector<2x128xf32>
    %292 = vector.extract_strided_slice %291 {offsets = [0, 0], sizes = [2, 32], strides = [1, 1]} : vector<2x128xf32> to vector<2x32xf32>
    %293 = vector.extract_strided_slice %291 {offsets = [0, 32], sizes = [2, 32], strides = [1, 1]} : vector<2x128xf32> to vector<2x32xf32>
    %294 = vector.extract_strided_slice %291 {offsets = [0, 96], sizes = [2, 32], strides = [1, 1]} : vector<2x128xf32> to vector<2x32xf32>
    %295 = vector.extract_strided_slice %286 {offsets = [0, 64], sizes = [2, 32], strides = [1, 1]} : vector<2x128xf32> to vector<2x32xf32>
    %296 = math.tanh %295 : vector<2x32xf32>
    %297 = arith.mulf %293, %261 : vector<2x32xf32>
    %298 = arith.mulf %292, %296 : vector<2x32xf32>
    %299 = arith.addf %297, %298 : vector<2x32xf32>
    %300 = math.tanh %299 : vector<2x32xf32>
    %301 = arith.mulf %294, %300 : vector<2x32xf32>
    %302 = tpu.concatenate %281, %301 in 1 : vector<2x32xf32>, vector<2x32xf32> -> vector<2x64xf32>
    %cst_61 = arith.constant dense<0.000000e+00> : vector<2x128xf32>
    %303 = tpu.matmul %302, %3, %cst_61 {dimension_numbers = #tpu.dot_dimension_numbers<[1], [0], [0], [1], [0, 0, 1, 1], [], []>} : vector<2x64xf32>, vector<64x128xf32>, vector<2x128xf32> -> vector<2x128xf32>
    %304 = arith.addf %303, %11 : vector<2x128xf32>
    %305 = arith.negf %304 : vector<2x128xf32>
    %306 = math.exp %305 : vector<2x128xf32>
    %cst_62 = arith.constant 1.000000e+00 : f32
    %307 = vector.broadcast %cst_62 : f32 to vector<2x128xf32>
    %308 = arith.addf %307, %306 : vector<2x128xf32>
    %309 = arith.divf %307, %308 : vector<2x128xf32>
    %310 = vector.extract_strided_slice %309 {offsets = [0, 0], sizes = [2, 32], strides = [1, 1]} : vector<2x128xf32> to vector<2x32xf32>
    %311 = vector.extract_strided_slice %309 {offsets = [0, 32], sizes = [2, 32], strides = [1, 1]} : vector<2x128xf32> to vector<2x32xf32>
    %312 = vector.extract_strided_slice %309 {offsets = [0, 96], sizes = [2, 32], strides = [1, 1]} : vector<2x128xf32> to vector<2x32xf32>
    %313 = vector.extract_strided_slice %304 {offsets = [0, 64], sizes = [2, 32], strides = [1, 1]} : vector<2x128xf32> to vector<2x32xf32>
    %314 = math.tanh %313 : vector<2x32xf32>
    %315 = arith.mulf %311, %279 : vector<2x32xf32>
    %316 = arith.mulf %310, %314 : vector<2x32xf32>
    %317 = arith.addf %315, %316 : vector<2x32xf32>
    %318 = math.tanh %317 : vector<2x32xf32>
    %319 = arith.mulf %312, %318 : vector<2x32xf32>
    %320 = tpu.concatenate %53, %91, %129, %167, %205, %243, %281, %319 in 1 : vector<2x32xf32>, vector<2x32xf32>, vector<2x32xf32>, vector<2x32xf32>, vector<2x32xf32>, vector<2x32xf32>, vector<2x32xf32>, vector<2x32xf32> -> vector<2x256xf32>
    %c0_63 = arith.constant 0 : index
    %c0_64 = arith.constant 0 : index
    %321 = vector.load %arg3[%c0_63, %c0_64] : memref<256x128xf32, #tpu.memory_space<vmem>>, vector<256x128xf32>
    %cst_65 = arith.constant dense<0.000000e+00> : vector<2x128xf32>
    %322 = tpu.matmul %320, %321, %cst_65 {dimension_numbers = #tpu.dot_dimension_numbers<[1], [0], [0], [1], [0, 0, 1, 1], [], []>} : vector<2x256xf32>, vector<256x128xf32>, vector<2x128xf32> -> vector<2x128xf32>
    %c0_66 = arith.constant 0 : index
    %c0_67 = arith.constant 0 : index
    %323 = vector.load %arg4[%c0_66, %c0_67] : memref<1x128xf32, #tpu.memory_space<vmem>>, vector<1x128xf32>
    %324 = vector.broadcast %323 : vector<1x128xf32> to vector<2x128xf32>
    %325 = arith.addf %322, %324 : vector<2x128xf32>
    %c0_68 = arith.constant 0 : index
    %c0_69 = arith.constant 0 : index
    %326 = vector.load %arg5[%c0_68, %c0_69] : memref<2x128xf32, #tpu.memory_space<vmem>>, vector<2x128xf32>
    tpu.vector_store %arg5[%c0_68, %c0_69], %325 {strides = array<i32>} : memref<2x128xf32, #tpu.memory_space<vmem>>, vector<2x128xf32>,
    return
  }
}

</mosaic_0001>

<llo_original>
// kernel: tpu_custom_call.1
$region0: #{tpu_custom_call.1}
  #allocation0 [shape = 'u32[]', space=smem, size = 0x4, offset = 0x4, fixed_abs, tag = 'smem constant byte address 0x4 - core index']
  #allocation1 [shape = 'u32[144,128]{1,0:T(1,128)}', space=vmem, size = 0x12000, scoped, tag = 'internal scratch']
  %s0 = inlined_call_operand.hbm [shape: f32[8,2,32], index: 0, kind: input, shape index: {}]
  %s1 = inlined_call_operand.hbm [shape: f32[2,64,128], index: 1, kind: input, shape index: {}]
  %s2 = inlined_call_operand.vmem [shape: f32[2,1,128], index: 2, kind: input, shape index: {}]
  %s3 = inlined_call_operand.hbm [shape: f32[256,128], index: 3, kind: input, shape index: {}]
  %s4 = inlined_call_operand.vmem [shape: f32[1,128], index: 4, kind: input, shape index: {}]
  %s5 = inlined_call_operand.hbm [shape: f32[2,128], index: 5, kind: output, shape index: {}]
  %s6 = sld [smem:[#allocation0]]
  $region42: #{tpu_custom_call.1} parent=0
    _
  %s8 = ssub.s32 1, %s6
  %s9 = scalar_select 0, %s8, %s6
  $region1: #{tpu_custom_call.1} parent=0
    #allocation2 [shape = 'u8[8192]{0}', space=vmem, size = 0x2000, scoped, tag = 'input window, operand 0, single buffered']
    #allocation3 [shape = 's32[1]{0}', space=sflag, size = 0x4, scoped, tag = 'scoped memory for tpu_custom_call.1']
    #allocation4 [shape = 's32[1]{0}', space=sflag, size = 0x4, scoped, tag = 'scoped memory for tpu_custom_call.1']
    #allocation5 [shape = 'u8[65536]{0}', space=vmem, size = 0x10000, scoped, tag = 'input window, operand 1, single buffered']
    #allocation6 [shape = 's32[1]{0}', space=sflag, size = 0x4, scoped, tag = 'scoped memory for tpu_custom_call.1']
    #allocation7 [shape = 'u8[131072]{0}', space=vmem, size = 0x20000, scoped, tag = 'input window, operand 3, single buffered']
    #allocation8 [shape = 'u8[1024]{0}', space=vmem, size = 0x400, scoped, tag = 'output window, operand 0, single buffered']
    %10 = vsyncpa [#allocation3], 0
    %11 = vsyncpa [#allocation6], 0
    %12 = vsyncpa [#allocation4], 0
    // Predicated region
    $region2: #{tpu_custom_call.1} parent=1 // pred_check
      _
    $region3: #{tpu_custom_call.1} parent=1 // pred_check_branch
      %14 = sbr.rel (0) target = $region5
    $region4: #{tpu_custom_call.1} parent=1 // pred_region
      %s16 = ssub.s32 256, 256
      %17 = vsyncadd [#allocation3], %s16
      %s18 = sshll.u32 [#allocation2], 4
      %s19 = int_to_ptr.vmem [resolvable:$true] %s18
      %24 = dma.hbm_to_vmem [thread:$0]  %s0, 256, %s19, [#allocation3], 32, 32, 2
    $region5: #{tpu_custom_call.1} parent=1 // pred_fallthru
      _
    // Predicated region
    $region6: #{tpu_custom_call.1} parent=1 // pred_check
      _
    $region7: #{tpu_custom_call.1} parent=1 // pred_check_branch
      %26 = sbr.rel (0) target = $region9
    $region8: #{tpu_custom_call.1} parent=1 // pred_region
      %s28 = ssub.s32 2048, 2048
      %29 = vsyncadd [#allocation6], %s28
      %s30 = sshll.u32 [#allocation5], 4
      %s31 = int_to_ptr.vmem [resolvable:$true] %s30
      %36 = dma.hbm_to_vmem [thread:$0]  %s1, 2048, %s31, [#allocation6], 128, 128, 8
    $region9: #{tpu_custom_call.1} parent=1 // pred_fallthru
      _
    // Predicated region
    $region10: #{tpu_custom_call.1} parent=1 // pred_check
      _
    $region11: #{tpu_custom_call.1} parent=1 // pred_check_branch
      %38 = sbr.rel (0) target = $region13
    $region12: #{tpu_custom_call.1} parent=1 // pred_region
      _
    $region13: #{tpu_custom_call.1} parent=1 // pred_fallthru
      _
    // Predicated region
    $region14: #{tpu_custom_call.1} parent=1 // pred_check
      _
    $region15: #{tpu_custom_call.1} parent=1 // pred_check_branch
      %40 = sbr.rel (0) target = $region17
    $region16: #{tpu_custom_call.1} parent=1 // pred_region
      %s42 = ssub.s32 4096, 4096
      %43 = vsyncadd [#allocation6], %s42
      %s44 = sshll.u32 [#allocation7], 4
      %s45 = int_to_ptr.vmem [resolvable:$true] %s44
      %50 = dma.hbm_to_vmem [thread:$0]  %s3, 4096, %s45, [#allocation6], 128, 128, 8
    $region17: #{tpu_custom_call.1} parent=1 // pred_fallthru
      _
    // Predicated region
    $region18: #{tpu_custom_call.1} parent=1 // pred_check
      _
    $region19: #{tpu_custom_call.1} parent=1 // pred_check_branch
      %52 = sbr.rel (0) target = $region21
    $region20: #{tpu_custom_call.1} parent=1 // pred_region
      _
    $region21: #{tpu_custom_call.1} parent=1 // pred_fallthru
      _
    // Predicated region
    $region22: #{tpu_custom_call.1} parent=1 // pred_check
      _
    $region23: #{tpu_custom_call.1} parent=1 // pred_check_branch
      %54 = sbr.rel (0) target = $region25
    $region24: #{tpu_custom_call.1} parent=1 // pred_region
      %55 = dma.done [#allocation3], 256
    $region25: #{tpu_custom_call.1} parent=1 // pred_fallthru
      _
    // Predicated region
    $region26: #{tpu_custom_call.1} parent=1 // pred_check
      _
    $region27: #{tpu_custom_call.1} parent=1 // pred_check_branch
      %57 = sbr.rel (0) target = $region29
    $region28: #{tpu_custom_call.1} parent=1 // pred_region
      %58 = dma.done [#allocation6], 2048
    $region29: #{tpu_custom_call.1} parent=1 // pred_fallthru
      _
    // Predicated region
    $region30: #{tpu_custom_call.1} parent=1 // pred_check
      _
    $region31: #{tpu_custom_call.1} parent=1 // pred_check_branch
      %60 = sbr.rel (0) target = $region33
    $region32: #{tpu_custom_call.1} parent=1 // pred_region
      %61 = dma.done [#allocation6], 4096
    $region33: #{tpu_custom_call.1} parent=1 // pred_fallthru
      _
    %v62 = vld [vmem:[#allocation5] sm:$0xff]
    %v63 = vld [vmem:[#allocation5 + $0x8] sm:$0xff]
    %v64 = vld [vmem:[#allocation5 + $0x10] sm:$0xff]
    %v65 = vld [vmem:[#allocation5 + $0x18] sm:$0xff]
    %v66 = vld [vmem:[#allocation5 + $0x20] sm:$0xff]
    %v67 = vld [vmem:[#allocation5 + $0x28] sm:$0xff]
    %v68 = vld [vmem:[#allocation5 + $0x30] sm:$0xff]
    %v69 = vld [vmem:[#allocation5 + $0x38] sm:$0xff]
    %s70 = scalar_lea.vmem [#allocation5], 64
    %v71 = vld [vmem:[%s70] sm:$0xff]
    %v72 = vld [vmem:[%s70 + $0x8] sm:$0xff]
    %v73 = vld [vmem:[%s70 + $0x10] sm:$0xff]
    %v74 = vld [vmem:[%s70 + $0x18] sm:$0xff]
    %v75 = vld [vmem:[%s70 + $0x20] sm:$0xff]
    %v76 = vld [vmem:[%s70 + $0x28] sm:$0xff]
    %v77 = vld [vmem:[%s70 + $0x30] sm:$0xff]
    %v78 = vld [vmem:[%s70 + $0x38] sm:$0xff]
    %v79 = vld [vmem:[%s2] sm:$0x1]
    %v81 = vlaneseq
    %v82 = vshrl.u32 %v81, 7
    %v83 = vsub.s32 0, %v82
    %v84 = vrot.slane %v79, %v83
    %s86 = scalar_lea.vmem %s2, 1
    %v87 = vld [vmem:[%s86] sm:$0x1]
    %v89 = vlaneseq
    %v90 = vshrl.u32 %v89, 7
    %v91 = vsub.s32 0, %v90
    %v92 = vrot.slane %v87, %v91
    %v94 = vld [vmem:[#allocation2] sm:$0x3]
    %96 = vrot.lane.b32.xlu0 %v94, 32
    %v97 = vpop.permute.xlu0 %96
    %vm99 = vcmask 261120
    %v100 = vsel %vm99, 0.0, %v97
    %vm101 = vcmask 523264
    %v103 = vsel %vm101, %v100, 0
    %105 = vmatprep.subr.mxu0 0.0
    %106 = vmatpush1.msra.mxu0 %v62
    %107 = vmatprep.subr.mxu0 0.0
    %108 = vmatpush1.msra.mxu0 %v63
    %109 = vmatprep.subr.mxu0 0.0
    %110 = vmatpush1.msra.mxu0 %v64
    %111 = vmatprep.subr.mxu0 0.0
    %112 = vmatpush1.msra.mxu0 %v65
    %113 = vmatprep.subr.mxu0 0.0
    %114 = vmatpush1.msra.mxu0 %v66
    %115 = vmatprep.subr.mxu0 0.0
    %116 = vmatpush1.msra.mxu0 %v67
    %117 = vmatprep.subr.mxu0 0.0
    %118 = vmatpush1.msra.mxu0 %v68
    %119 = vmatprep.subr.mxu0 0.0
    %120 = vmatpush1.msra.mxu0 %v69
    %121 = vmatprep.subr.mxu0 0.0
    %122 = vmatpush1.msra.mxu0 0.0
    %123 = vmatprep.subr.mxu0 0.0
    %124 = vmatpush1.msra.mxu0 0.0
    %125 = vmatprep.subr.mxu0 0.0
    %126 = vmatpush1.msra.mxu0 0.0
    %127 = vmatprep.subr.mxu0 0.0
    %128 = vmatpush1.msra.mxu0 0.0
    %129 = vmatprep.subr.mxu0 0.0
    %130 = vmatpush1.msra.mxu0 0.0
    %131 = vmatprep.subr.mxu0 0.0
    %132 = vmatpush1.msra.mxu0 0.0
    %133 = vmatprep.subr.mxu0 0.0
    %134 = vmatpush1.msra.mxu0 0.0
    %135 = vmatprep.subr.mxu0 0.0
    %136 = vmatpush1.msra.mxu0 0.0
    %137 = vmatprep.subr.mxu0 0.0
    %138 = vmatpush1.msra.mxu0 0.0
    %139 = vmatprep.subr.mxu0 0.0
    %140 = vmatpush1.msra.mxu0 0.0
    %141 = vmatprep.subr.mxu0 0.0
    %142 = vmatpush1.msra.mxu0 0.0
    %143 = vmatprep.subr.mxu0 0.0
    %144 = vmatpush1.msra.mxu0 0.0
    %145 = vmatprep.subr.mxu0 0.0
    %146 = vmatpush1.msra.mxu0 0.0
    %147 = vmatprep.subr.mxu0 0.0
    %148 = vmatpush1.msra.mxu0 0.0
    %149 = vmatprep.subr.mxu0 0.0
    %150 = vmatpush1.msra.mxu0 0.0
    %151 = vmatprep.subr.mxu0 0.0
    %152 = vmatpush1.msra.mxu0 0.0
    %153 = vmatprep.subr.mxu0 0.0
    %154 = vmatpush1.msra.mxu0 0.0
    %155 = vmatprep.subr.mxu0 0.0
    %156 = vmatpush1.msra.mxu0 0.0
    %157 = vmatprep.subr.mxu0 0.0
    %158 = vmatpush1.msra.mxu0 0.0
    %159 = vmatprep.subr.mxu0 0.0
    %160 = vmatpush1.msra.mxu0 0.0
    %161 = vmatprep.subr.mxu0 0.0
    %162 = vmatpush1.msra.mxu0 0.0
    %163 = vmatprep.subr.mxu0 0.0
    %164 = vmatpush1.msra.mxu0 0.0
    %165 = vmatprep.subr.mxu0 0.0
    %166 = vmatpush1.msra.mxu0 0.0
    %167 = vmatprep.subr.mxu0 0.0
    %168 = vmatpush1.msra.mxu0 0.0
    %169 = vmatprep.mubr.f32.mxu0 0.0
    %170 = vmatmul.mubr.f32.gmra.mrb[0].mxu0 %v103
    %v171 = vpop.f32.mrb[0].mxu0
    %v172 = vadd.f32 %v84, %v171
    %v173 = vpop.f32.mrb[0].mxu0
    %174 = vdwg.mxu0
    %v175 = vxor.u32 %v172, 2147483648
    %v176 = vmul.f32 %v175, 1.442695
    %v177 = vpow.pop %v176
    %v178 = vadd.f32 %v177, 1.0
    %v179 = vrcp.pop %v178
    %v180 = vmul.f32 1.0, %v179
    %v181 = vtanh.pop %v172
    %v182 = vmul.f32 %v180, 0.0
    %184 = vrot.lane.b32.xlu0 %v181, 64
    %v185 = vpop.permute.xlu0 %184
    %v187 = vmul.f32 %v180, %v185
    %189 = vrot.lane.b32.xlu0 %v187, 32
    %v190 = vpop.permute.xlu0 %189
    %v192 = vadd.f32 %v182, %v190
    %v193 = vtanh.pop %v192
    %195 = vrot.lane.b32.xlu0 %v193, 64
    %v196 = vpop.permute.xlu0 %195
    %v198 = vmul.f32 %v180, %v196
    %200 = vrot.lane.b32.xlu0 %v198, 64
    %v201 = vpop.permute.xlu0 %200
    %v203 = vsel %vm99, 0.0, %v201
    %v205 = vsel %vm101, %v203, 0
    %207 = vmatprep.subr.mxu0 0.0
    %208 = vmatpush1.msra.mxu0 %v71
    %209 = vmatprep.subr.mxu0 0.0
    %210 = vmatpush1.msra.mxu0 %v72
    %211 = vmatprep.subr.mxu0 0.0
    %212 = vmatpush1.msra.mxu0 %v73
    %213 = vmatprep.subr.mxu0 0.0
    %214 = vmatpush1.msra.mxu0 %v74
    %215 = vmatprep.subr.mxu0 0.0
    %216 = vmatpush1.msra.mxu0 %v75
    %217 = vmatprep.subr.mxu0 0.0
    %218 = vmatpush1.msra.mxu0 %v76
    %219 = vmatprep.subr.mxu0 0.0
    %220 = vmatpush1.msra.mxu0 %v77
    %221 = vmatprep.subr.mxu0 0.0
    %222 = vmatpush1.msra.mxu0 %v78
    %223 = vmatprep.subr.mxu0 0.0
    %224 = vmatpush1.msra.mxu0 0.0
    %225 = vmatprep.subr.mxu0 0.0
    %226 = vmatpush1.msra.mxu0 0.0
    %227 = vmatprep.subr.mxu0 0.0
    %228 = vmatpush1.msra.mxu0 0.0
    %229 = vmatprep.subr.mxu0 0.0
    %230 = vmatpush1.msra.mxu0 0.0
    %231 = vmatprep.subr.mxu0 0.0
    %232 = vmatpush1.msra.mxu0 0.0
    %233 = vmatprep.subr.mxu0 0.0
    %234 = vmatpush1.msra.mxu0 0.0
    %235 = vmatprep.subr.mxu0 0.0
    %236 = vmatpush1.msra.mxu0 0.0
    %237 = vmatprep.subr.mxu0 0.0
    %238 = vmatpush1.msra.mxu0 0.0
    %239 = vmatprep.subr.mxu0 0.0
    %240 = vmatpush1.msra.mxu0 0.0
    %241 = vmatprep.subr.mxu0 0.0
    %242 = vmatpush1.msra.mxu0 0.0
    %243 = vmatprep.subr.mxu0 0.0
    %244 = vmatpush1.msra.mxu0 0.0
    %245 = vmatprep.subr.mxu0 0.0
    %246 = vmatpush1.msra.mxu0 0.0
    %247 = vmatprep.subr.mxu0 0.0
    %248 = vmatpush1.msra.mxu0 0.0
    %249 = vmatprep.subr.mxu0 0.0
    %250 = vmatpush1.msra.mxu0 0.0
    %251 = vmatprep.subr.mxu0 0.0
    %252 = vmatpush1.msra.mxu0 0.0
    %253 = vmatprep.subr.mxu0 0.0
    %254 = vmatpush1.msra.mxu0 0.0
    %255 = vmatprep.subr.mxu0 0.0
    %256 = vmatpush1.msra.mxu0 0.0
    %257 = vmatprep.subr.mxu0 0.0
    %258 = vmatpush1.msra.mxu0 0.0
    %259 = vmatprep.subr.mxu0 0.0
    %260 = vmatpush1.msra.mxu0 0.0
    %261 = vmatprep.subr.mxu0 0.0
    %262 = vmatpush1.msra.mxu0 0.0
    %263 = vmatprep.subr.mxu0 0.0
    %264 = vmatpush1.msra.mxu0 0.0
    %265 = vmatprep.subr.mxu0 0.0
    %266 = vmatpush1.msra.mxu0 0.0
    %267 = vmatprep.subr.mxu0 0.0
    %268 = vmatpush1.msra.mxu0 0.0
    %269 = vmatprep.subr.mxu0 0.0
    %270 = vmatpush1.msra.mxu0 0.0
    %271 = vmatprep.mubr.f32.mxu0 0.0
    %272 = vmatmul.mubr.f32.gmra.mrb[0].mxu0 %v205
    %v273 = vpop.f32.mrb[0].mxu0
    %v274 = vadd.f32 %v92, %v273
    %v275 = vpop.f32.mrb[0].mxu0
    %276 = vdwg.mxu0
    %v277 = vxor.u32 %v274, 2147483648
    %v278 = vmul.f32 %v277, 1.442695
    %v279 = vpow.pop %v278
    %v280 = vadd.f32 %v279, 1.0
    %v281 = vrcp.pop %v280
    %v282 = vmul.f32 1.0, %v281
    %v283 = vtanh.pop %v274
    %v284 = vmul.f32 %v282, 0.0
    %286 = vrot.lane.b32.xlu0 %v283, 64
    %v287 = vpop.permute.xlu0 %286
    %v289 = vmul.f32 %v282, %v287
    %291 = vrot.lane.b32.xlu0 %v289, 32
    %v292 = vpop.permute.xlu0 %291
    %v294 = vadd.f32 %v284, %v292
    %v295 = vtanh.pop %v294
    %297 = vrot.lane.b32.xlu0 %v295, 64
    %v298 = vpop.permute.xlu0 %297
    %v300 = vmul.f32 %v282, %v298
    %s301 = scalar_lea.vmem [#allocation2], 2
    %v302 = vld [vmem:[%s301] sm:$0x3]
    %303 = vrot.lane.b32.xlu0 %v198, 32
    %v304 = vpop.permute.xlu0 %303
    %307 = vrot.lane.b32.xlu0 %v302, 32
    %v308 = vpop.permute.xlu0 %307
    %v310 = vsel %vm99, %v304, %v308
    %v312 = vsel %vm101, %v310, 0
    %314 = vmatprep.subr.mxu0 0.0
    %315 = vmatpush1.msra.mxu0 %v62
    %316 = vmatprep.subr.mxu0 0.0
    %317 = vmatpush1.msra.mxu0 %v63
    %318 = vmatprep.subr.mxu0 0.0
    %319 = vmatpush1.msra.mxu0 %v64
    %320 = vmatprep.subr.mxu0 0.0
    %321 = vmatpush1.msra.mxu0 %v65
    %322 = vmatprep.subr.mxu0 0.0
    %323 = vmatpush1.msra.mxu0 %v66
    %324 = vmatprep.subr.mxu0 0.0
    %325 = vmatpush1.msra.mxu0 %v67
    %326 = vmatprep.subr.mxu0 0.0
    %327 = vmatpush1.msra.mxu0 %v68
    %328 = vmatprep.subr.mxu0 0.0
    %329 = vmatpush1.msra.mxu0 %v69
    %330 = vmatprep.subr.mxu0 0.0
    %331 = vmatpush1.msra.mxu0 0.0
    %332 = vmatprep.subr.mxu0 0.0
    %333 = vmatpush1.msra.mxu0 0.0
    %334 = vmatprep.subr.mxu0 0.0
    %335 = vmatpush1.msra.mxu0 0.0
    %336 = vmatprep.subr.mxu0 0.0
    %337 = vmatpush1.msra.mxu0 0.0
    %338 = vmatprep.subr.mxu0 0.0
    %339 = vmatpush1.msra.mxu0 0.0
    %340 = vmatprep.subr.mxu0 0.0
    %341 = vmatpush1.msra.mxu0 0.0
    %342 = vmatprep.subr.mxu0 0.0
    %343 = vmatpush1.msra.mxu0 0.0
    %344 = vmatprep.subr.mxu0 0.0
    %345 = vmatpush1.msra.mxu0 0.0
    %346 = vmatprep.subr.mxu0 0.0
    %347 = vmatpush1.msra.mxu0 0.0
    %348 = vmatprep.subr.mxu0 0.0
    %349 = vmatpush1.msra.mxu0 0.0
    %350 = vmatprep.subr.mxu0 0.0
    %351 = vmatpush1.msra.mxu0 0.0
    %352 = vmatprep.subr.mxu0 0.0
    %353 = vmatpush1.msra.mxu0 0.0
    %354 = vmatprep.subr.mxu0 0.0
    %355 = vmatpush1.msra.mxu0 0.0
    %356 = vmatprep.subr.mxu0 0.0
    %357 = vmatpush1.msra.mxu0 0.0
    %358 = vmatprep.subr.mxu0 0.0
    %359 = vmatpush1.msra.mxu0 0.0
    %360 = vmatprep.subr.mxu0 0.0
    %361 = vmatpush1.msra.mxu0 0.0
    %362 = vmatprep.subr.mxu0 0.0
    %363 = vmatpush1.msra.mxu0 0.0
    %364 = vmatprep.subr.mxu0 0.0
    %365 = vmatpush1.msra.mxu0 0.0
    %366 = vmatprep.subr.mxu0 0.0
    %367 = vmatpush1.msra.mxu0 0.0
    %368 = vmatprep.subr.mxu0 0.0
    %369 = vmatpush1.msra.mxu0 0.0
    %370 = vmatprep.subr.mxu0 0.0
    %371 = vmatpush1.msra.mxu0 0.0
    %372 = vmatprep.subr.mxu0 0.0
    %373 = vmatpush1.msra.mxu0 0.0
    %374 = vmatprep.subr.mxu0 0.0
    %375 = vmatpush1.msra.mxu0 0.0
    %376 = vmatprep.subr.mxu0 0.0
    %377 = vmatpush1.msra.mxu0 0.0
    %378 = vmatprep.mubr.f32.mxu0 0.0
    %379 = vmatmul.mubr.f32.gmra.mrb[0].mxu0 %v312
    %v380 = vpop.f32.mrb[0].mxu0
    %v381 = vadd.f32 %v84, %v380
    %v382 = vpop.f32.mrb[0].mxu0
    %383 = vdwg.mxu0
    %v384 = vxor.u32 %v381, 2147483648
    %v385 = vmul.f32 %v384, 1.442695
    %v386 = vpow.pop %v385
    %v387 = vadd.f32 %v386, 1.0
    %v388 = vrcp.pop %v387
    %v389 = vmul.f32 1.0, %v388
    %v390 = vtanh.pop %v381
    %v391 = vmul.f32 %v389, %v192
    %393 = vrot.lane.b32.xlu0 %v390, 64
    %v394 = vpop.permute.xlu0 %393
    %v396 = vmul.f32 %v389, %v394
    %398 = vrot.lane.b32.xlu0 %v396, 32
    %v399 = vpop.permute.xlu0 %398
    %v401 = vadd.f32 %v391, %v399
    %v402 = vtanh.pop %v401
    %404 = vrot.lane.b32.xlu0 %v402, 64
    %v405 = vpop.permute.xlu0 %404
    %v407 = vmul.f32 %v389, %v405
    %409 = vrot.lane.b32.xlu0 %v300, 32
    %v410 = vpop.permute.xlu0 %409
    %413 = vrot.lane.b32.xlu0 %v407, 64
    %v414 = vpop.permute.xlu0 %413
    %v416 = vsel %vm99, %v410, %v414
    %v418 = vsel %vm101, %v416, 0
    %420 = vmatprep.subr.mxu0 0.0
    %421 = vmatpush1.msra.mxu0 %v71
    %422 = vmatprep.subr.mxu0 0.0
    %423 = vmatpush1.msra.mxu0 %v72
    %424 = vmatprep.subr.mxu0 0.0
    %425 = vmatpush1.msra.mxu0 %v73
    %426 = vmatprep.subr.mxu0 0.0
    %427 = vmatpush1.msra.mxu0 %v74
    %428 = vmatprep.subr.mxu0 0.0
    %429 = vmatpush1.msra.mxu0 %v75
    %430 = vmatprep.subr.mxu0 0.0
    %431 = vmatpush1.msra.mxu0 %v76
    %432 = vmatprep.subr.mxu0 0.0
    %433 = vmatpush1.msra.mxu0 %v77
    %434 = vmatprep.subr.mxu0 0.0
    %435 = vmatpush1.msra.mxu0 %v78
    %436 = vmatprep.subr.mxu0 0.0
    %437 = vmatpush1.msra.mxu0 0.0
    %438 = vmatprep.subr.mxu0 0.0
    %439 = vmatpush1.msra.mxu0 0.0
    %440 = vmatprep.subr.mxu0 0.0
    %441 = vmatpush1.msra.mxu0 0.0
    %442 = vmatprep.subr.mxu0 0.0
    %443 = vmatpush1.msra.mxu0 0.0
    %444 = vmatprep.subr.mxu0 0.0
    %445 = vmatpush1.msra.mxu0 0.0
    %446 = vmatprep.subr.mxu0 0.0
    %447 = vmatpush1.msra.mxu0 0.0
    %448 = vmatprep.subr.mxu0 0.0
    %449 = vmatpush1.msra.mxu0 0.0
    %450 = vmatprep.subr.mxu0 0.0
    %451 = vmatpush1.msra.mxu0 0.0
    %452 = vmatprep.subr.mxu0 0.0
    %453 = vmatpush1.msra.mxu0 0.0
    %454 = vmatprep.subr.mxu0 0.0
    %455 = vmatpush1.msra.mxu0 0.0
    %456 = vmatprep.subr.mxu0 0.0
    %457 = vmatpush1.msra.mxu0 0.0
    %458 = vmatprep.subr.mxu0 0.0
    %459 = vmatpush1.msra.mxu0 0.0
    %460 = vmatprep.subr.mxu0 0.0
    %461 = vmatpush1.msra.mxu0 0.0
    %462 = vmatprep.subr.mxu0 0.0
    %463 = vmatpush1.msra.mxu0 0.0
    %464 = vmatprep.subr.mxu0 0.0
    %465 = vmatpush1.msra.mxu0 0.0
    %466 = vmatprep.subr.mxu0 0.0
    %467 = vmatpush1.msra.mxu0 0.0
    %468 = vmatprep.subr.mxu0 0.0
    %469 = vmatpush1.msra.mxu0 0.0
    %470 = vmatprep.subr.mxu0 0.0
    %471 = vmatpush1.msra.mxu0 0.0
    %472 = vmatprep.subr.mxu0 0.0
    %473 = vmatpush1.msra.mxu0 0.0
    %474 = vmatprep.subr.mxu0 0.0
    %475 = vmatpush1.msra.mxu0 0.0
    %476 = vmatprep.subr.mxu0 0.0
    %477 = vmatpush1.msra.mxu0 0.0
    %478 = vmatprep.subr.mxu0 0.0
    %479 = vmatpush1.msra.mxu0 0.0
    %480 = vmatprep.subr.mxu0 0.0
    %481 = vmatpush1.msra.mxu0 0.0
    %482 = vmatprep.subr.mxu0 0.0
    %483 = vmatpush1.msra.mxu0 0.0
    %484 = vmatprep.mubr.f32.mxu0 0.0
    %485 = vmatmul.mubr.f32.gmra.mrb[0].mxu0 %v418
    %v486 = vpop.f32.mrb[0].mxu0
    %v487 = vadd.f32 %v92, %v486
    %v488 = vpop.f32.mrb[0].mxu0
    %489 = vdwg.mxu0
    %v490 = vxor.u32 %v487, 2147483648
    %v491 = vmul.f32 %v490, 1.442695
    %v492 = vpow.pop %v491
    %v493 = vadd.f32 %v492, 1.0
    %v494 = vrcp.pop %v493
    %v495 = vmul.f32 1.0, %v494
    %v496 = vtanh.pop %v487
    %v497 = vmul.f32 %v495, %v294
    %499 = vrot.lane.b32.xlu0 %v496, 64
    %v500 = vpop.permute.xlu0 %499
    %v502 = vmul.f32 %v495, %v500
    %504 = vrot.lane.b32.xlu0 %v502, 32
    %v505 = vpop.permute.xlu0 %504
    %v507 = vadd.f32 %v497, %v505
    %v508 = vtanh.pop %v507
    %510 = vrot.lane.b32.xlu0 %v508, 64
    %v511 = vpop.permute.xlu0 %510
    %v513 = vmul.f32 %v495, %v511
    %s514 = scalar_lea.vmem [#allocation2], 4
    %v515 = vld [vmem:[%s514] sm:$0x3]
    %516 = vrot.lane.b32.xlu0 %v407, 32
    %v517 = vpop.permute.xlu0 %516
    %520 = vrot.lane.b32.xlu0 %v515, 32
    %v521 = vpop.permute.xlu0 %520
    %v523 = vsel %vm99, %v517, %v521
    %v525 = vsel %vm101, %v523, 0
    %527 = vmatprep.subr.mxu0 0.0
    %528 = vmatpush1.msra.mxu0 %v62
    %529 = vmatprep.subr.mxu0 0.0
    %530 = vmatpush1.msra.mxu0 %v63
    %531 = vmatprep.subr.mxu0 0.0
    %532 = vmatpush1.msra.mxu0 %v64
    %533 = vmatprep.subr.mxu0 0.0
    %534 = vmatpush1.msra.mxu0 %v65
    %535 = vmatprep.subr.mxu0 0.0
    %536 = vmatpush1.msra.mxu0 %v66
    %537 = vmatprep.subr.mxu0 0.0
    %538 = vmatpush1.msra.mxu0 %v67
    %539 = vmatprep.subr.mxu0 0.0
    %540 = vmatpush1.msra.mxu0 %v68
    %541 = vmatprep.subr.mxu0 0.0
    %542 = vmatpush1.msra.mxu0 %v69
    %543 = vmatprep.subr.mxu0 0.0
    %544 = vmatpush1.msra.mxu0 0.0
    %545 = vmatprep.subr.mxu0 0.0
    %546 = vmatpush1.msra.mxu0 0.0
    %547 = vmatprep.subr.mxu0 0.0
    %548 = vmatpush1.msra.mxu0 0.0
    %549 = vmatprep.subr.mxu0 0.0
    %550 = vmatpush1.msra.mxu0 0.0
    %551 = vmatprep.subr.mxu0 0.0
    %552 = vmatpush1.msra.mxu0 0.0
    %553 = vmatprep.subr.mxu0 0.0
    %554 = vmatpush1.msra.mxu0 0.0
    %555 = vmatprep.subr.mxu0 0.0
    %556 = vmatpush1.msra.mxu0 0.0
    %557 = vmatprep.subr.mxu0 0.0
    %558 = vmatpush1.msra.mxu0 0.0
    %559 = vmatprep.subr.mxu0 0.0
    %560 = vmatpush1.msra.mxu0 0.0
    %561 = vmatprep.subr.mxu0 0.0
    %562 = vmatpush1.msra.mxu0 0.0
    %563 = vmatprep.subr.mxu0 0.0
    %564 = vmatpush1.msra.mxu0 0.0
    %565 = vmatprep.subr.mxu0 0.0
    %566 = vmatpush1.msra.mxu0 0.0
    %567 = vmatprep.subr.mxu0 0.0
    %568 = vmatpush1.msra.mxu0 0.0
    %569 = vmatprep.subr.mxu0 0.0
    %570 = vmatpush1.msra.mxu0 0.0
    %571 = vmatprep.subr.mxu0 0.0
    %572 = vmatpush1.msra.mxu0 0.0
    %573 = vmatprep.subr.mxu0 0.0
    %574 = vmatpush1.msra.mxu0 0.0
    %575 = vmatprep.subr.mxu0 0.0
    %576 = vmatpush1.msra.mxu0 0.0
    %577 = vmatprep.subr.mxu0 0.0
    %578 = vmatpush1.msra.mxu0 0.0
    %579 = vmatprep.subr.mxu0 0.0
    %580 = vmatpush1.msra.mxu0 0.0
    %581 = vmatprep.subr.mxu0 0.0
    %582 = vmatpush1.msra.mxu0 0.0
    %583 = vmatprep.subr.mxu0 0.0
    %584 = vmatpush1.msra.mxu0 0.0
    %585 = vmatprep.subr.mxu0 0.0
    %586 = vmatpush1.msra.mxu0 0.0
    %587 = vmatprep.subr.mxu0 0.0
    %588 = vmatpush1.msra.mxu0 0.0
    %589 = vmatprep.subr.mxu0 0.0
    %590 = vmatpush1.msra.mxu0 0.0
    %591 = vmatprep.mubr.f32.mxu0 0.0
    %592 = vmatmul.mubr.f32.gmra.mrb[0].mxu0 %v525
    %v593 = vpop.f32.mrb[0].mxu0
    %v594 = vadd.f32 %v84, %v593
    %v595 = vpop.f32.mrb[0].mxu0
    %596 = vdwg.mxu0
    %v597 = vxor.u32 %v594, 2147483648
    %v598 = vmul.f32 %v597, 1.442695
    %v599 = vpow.pop %v598
    %v600 = vadd.f32 %v599, 1.0
    %v601 = vrcp.pop %v600
    %v602 = vmul.f32 1.0, %v601
    %v603 = vtanh.pop %v594
    %v604 = vmul.f32 %v602, %v401
    %606 = vrot.lane.b32.xlu0 %v603, 64
    %v607 = vpop.permute.xlu0 %606
    %v609 = vmul.f32 %v602, %v607
    %611 = vrot.lane.b32.xlu0 %v609, 32
    %v612 = vpop.permute.xlu0 %611
    %v614 = vadd.f32 %v604, %v612
    %v615 = vtanh.pop %v614
    %617 = vrot.lane.b32.xlu0 %v615, 64
    %v618 = vpop.permute.xlu0 %617
    %v620 = vmul.f32 %v602, %v618
    %622 = vrot.lane.b32.xlu0 %v513, 32
    %v623 = vpop.permute.xlu0 %622
    %626 = vrot.lane.b32.xlu0 %v620, 64
    %v627 = vpop.permute.xlu0 %626
    %v629 = vsel %vm99, %v623, %v627
    %v631 = vsel %vm101, %v629, 0
    %633 = vmatprep.subr.mxu0 0.0
    %634 = vmatpush1.msra.mxu0 %v71
    %635 = vmatprep.subr.mxu0 0.0
    %636 = vmatpush1.msra.mxu0 %v72
    %637 = vmatprep.subr.mxu0 0.0
    %638 = vmatpush1.msra.mxu0 %v73
    %639 = vmatprep.subr.mxu0 0.0
    %640 = vmatpush1.msra.mxu0 %v74
    %641 = vmatprep.subr.mxu0 0.0
    %642 = vmatpush1.msra.mxu0 %v75
    %643 = vmatprep.subr.mxu0 0.0
    %644 = vmatpush1.msra.mxu0 %v76
    %645 = vmatprep.subr.mxu0 0.0
    %646 = vmatpush1.msra.mxu0 %v77
    %647 = vmatprep.subr.mxu0 0.0
    %648 = vmatpush1.msra.mxu0 %v78
    %649 = vmatprep.subr.mxu0 0.0
    %650 = vmatpush1.msra.mxu0 0.0
    %651 = vmatprep.subr.mxu0 0.0
    %652 = vmatpush1.msra.mxu0 0.0
    %653 = vmatprep.subr.mxu0 0.0
    %654 = vmatpush1.msra.mxu0 0.0
    %655 = vmatprep.subr.mxu0 0.0
    %656 = vmatpush1.msra.mxu0 0.0
    %657 = vmatprep.subr.mxu0 0.0
    %658 = vmatpush1.msra.mxu0 0.0
    %659 = vmatprep.subr.mxu0 0.0
    %660 = vmatpush1.msra.mxu0 0.0
    %661 = vmatprep.subr.mxu0 0.0
    %662 = vmatpush1.msra.mxu0 0.0
    %663 = vmatprep.subr.mxu0 0.0
    %664 = vmatpush1.msra.mxu0 0.0
    %665 = vmatprep.subr.mxu0 0.0
    %666 = vmatpush1.msra.mxu0 0.0
    %667 = vmatprep.subr.mxu0 0.0
    %668 = vmatpush1.msra.mxu0 0.0
    %669 = vmatprep.subr.mxu0 0.0
    %670 = vmatpush1.msra.mxu0 0.0
    %671 = vmatprep.subr.mxu0 0.0
    %672 = vmatpush1.msra.mxu0 0.0
    %673 = vmatprep.subr.mxu0 0.0
    %674 = vmatpush1.msra.mxu0 0.0
    %675 = vmatprep.subr.mxu0 0.0
    %676 = vmatpush1.msra.mxu0 0.0
    %677 = vmatprep.subr.mxu0 0.0
    %678 = vmatpush1.msra.mxu0 0.0
    %679 = vmatprep.subr.mxu0 0.0
    %680 = vmatpush1.msra.mxu0 0.0
    %681 = vmatprep.subr.mxu0 0.0
    %682 = vmatpush1.msra.mxu0 0.0
    %683 = vmatprep.subr.mxu0 0.0
    %684 = vmatpush1.msra.mxu0 0.0
    %685 = vmatprep.subr.mxu0 0.0
    %686 = vmatpush1.msra.mxu0 0.0
    %687 = vmatprep.subr.mxu0 0.0
    %688 = vmatpush1.msra.mxu0 0.0
    %689 = vmatprep.subr.mxu0 0.0
    %690 = vmatpush1.msra.mxu0 0.0
    %691 = vmatprep.subr.mxu0 0.0
    %692 = vmatpush1.msra.mxu0 0.0
    %693 = vmatprep.subr.mxu0 0.0
    %694 = vmatpush1.msra.mxu0 0.0
    %695 = vmatprep.subr.mxu0 0.0
    %696 = vmatpush1.msra.mxu0 0.0
    %697 = vmatprep.mubr.f32.mxu0 0.0
    %698 = vmatmul.mubr.f32.gmra.mrb[0].mxu0 %v631
    %v699 = vpop.f32.mrb[0].mxu0
    %v700 = vadd.f32 %v92, %v699
    %v701 = vpop.f32.mrb[0].mxu0
    %702 = vdwg.mxu0
    %v703 = vxor.u32 %v700, 2147483648
    %v704 = vmul.f32 %v703, 1.442695
    %v705 = vpow.pop %v704
    %v706 = vadd.f32 %v705, 1.0
    %v707 = vrcp.pop %v706
    %v708 = vmul.f32 1.0, %v707
    %v709 = vtanh.pop %v700
    %v710 = vmul.f32 %v708, %v507
    %712 = vrot.lane.b32.xlu0 %v709, 64
    %v713 = vpop.permute.xlu0 %712
    %v715 = vmul.f32 %v708, %v713
    %717 = vrot.lane.b32.xlu0 %v715, 32
    %v718 = vpop.permute.xlu0 %717
    %v720 = vadd.f32 %v710, %v718
    %v721 = vtanh.pop %v720
    %723 = vrot.lane.b32.xlu0 %v721, 64
    %v724 = vpop.permute.xlu0 %723
    %v726 = vmul.f32 %v708, %v724
    %s727 = scalar_lea.vmem [#allocation2], 6
    %v728 = vld [vmem:[%s727] sm:$0x3]
    %729 = vrot.lane.b32.xlu0 %v620, 32
    %v730 = vpop.permute.xlu0 %729
    %733 = vrot.lane.b32.xlu0 %v728, 32
    %v734 = vpop.permute.xlu0 %733
    %v736 = vsel %vm99, %v730, %v734
    %v738 = vsel %vm101, %v736, 0
    %740 = vmatprep.subr.mxu0 0.0
    %741 = vmatpush1.msra.mxu0 %v62
    %742 = vmatprep.subr.mxu0 0.0
    %743 = vmatpush1.msra.mxu0 %v63
    %744 = vmatprep.subr.mxu0 0.0
    %745 = vmatpush1.msra.mxu0 %v64
    %746 = vmatprep.subr.mxu0 0.0
    %747 = vmatpush1.msra.mxu0 %v65
    %748 = vmatprep.subr.mxu0 0.0
    %749 = vmatpush1.msra.mxu0 %v66
    %750 = vmatprep.subr.mxu0 0.0
    %751 = vmatpush1.msra.mxu0 %v67
    %752 = vmatprep.subr.mxu0 0.0
    %753 = vmatpush1.msra.mxu0 %v68
    %754 = vmatprep.subr.mxu0 0.0
    %755 = vmatpush1.msra.mxu0 %v69
    %756 = vmatprep.subr.mxu0 0.0
    %757 = vmatpush1.msra.mxu0 0.0
    %758 = vmatprep.subr.mxu0 0.0
    %759 = vmatpush1.msra.mxu0 0.0
    %760 = vmatprep.subr.mxu0 0.0
    %761 = vmatpush1.msra.mxu0 0.0
    %762 = vmatprep.subr.mxu0 0.0
    %763 = vmatpush1.msra.mxu0 0.0
    %764 = vmatprep.subr.mxu0 0.0
    %765 = vmatpush1.msra.mxu0 0.0
    %766 = vmatprep.subr.mxu0 0.0
    %767 = vmatpush1.msra.mxu0 0.0
    %768 = vmatprep.subr.mxu0 0.0
    %769 = vmatpush1.msra.mxu0 0.0
    %770 = vmatprep.subr.mxu0 0.0
    %771 = vmatpush1.msra.mxu0 0.0
    %772 = vmatprep.subr.mxu0 0.0
    %773 = vmatpush1.msra.mxu0 0.0
    %774 = vmatprep.subr.mxu0 0.0
    %775 = vmatpush1.msra.mxu0 0.0
    %776 = vmatprep.subr.mxu0 0.0
    %777 = vmatpush1.msra.mxu0 0.0
    %778 = vmatprep.subr.mxu0 0.0
    %779 = vmatpush1.msra.mxu0 0.0
    %780 = vmatprep.subr.mxu0 0.0
    %781 = vmatpush1.msra.mxu0 0.0
    %782 = vmatprep.subr.mxu0 0.0
    %783 = vmatpush1.msra.mxu0 0.0
    %784 = vmatprep.subr.mxu0 0.0
    %785 = vmatpush1.msra.mxu0 0.0
    %786 = vmatprep.subr.mxu0 0.0
    %787 = vmatpush1.msra.mxu0 0.0
    %788 = vmatprep.subr.mxu0 0.0
    %789 = vmatpush1.msra.mxu0 0.0
    %790 = vmatprep.subr.mxu0 0.0
    %791 = vmatpush1.msra.mxu0 0.0
    %792 = vmatprep.subr.mxu0 0.0
    %793 = vmatpush1.msra.mxu0 0.0
    %794 = vmatprep.subr.mxu0 0.0
    %795 = vmatpush1.msra.mxu0 0.0
    %796 = vmatprep.subr.mxu0 0.0
    %797 = vmatpush1.msra.mxu0 0.0
    %798 = vmatprep.subr.mxu0 0.0
    %799 = vmatpush1.msra.mxu0 0.0
    %800 = vmatprep.subr.mxu0 0.0
    %801 = vmatpush1.msra.mxu0 0.0
    %802 = vmatprep.subr.mxu0 0.0
    %803 = vmatpush1.msra.mxu0 0.0
    %804 = vmatprep.mubr.f32.mxu0 0.0
    %805 = vmatmul.mubr.f32.gmra.mrb[0].mxu0 %v738
    %v806 = vpop.f32.mrb[0].mxu0
    %v807 = vadd.f32 %v84, %v806
    %v808 = vpop.f32.mrb[0].mxu0
    %809 = vdwg.mxu0
    %v810 = vxor.u32 %v807, 2147483648
    %v811 = vmul.f32 %v810, 1.442695
    %v812 = vpow.pop %v811
    %v813 = vadd.f32 %v812, 1.0
    %v814 = vrcp.pop %v813
    %v815 = vmul.f32 1.0, %v814
    %v816 = vtanh.pop %v807
    %v817 = vmul.f32 %v815, %v614
    %819 = vrot.lane.b32.xlu0 %v816, 64
    %v820 = vpop.permute.xlu0 %819
    %v822 = vmul.f32 %v815, %v820
    %824 = vrot.lane.b32.xlu0 %v822, 32
    %v825 = vpop.permute.xlu0 %824
    %v827 = vadd.f32 %v817, %v825
    %v828 = vtanh.pop %v827
    %830 = vrot.lane.b32.xlu0 %v828, 64
    %v831 = vpop.permute.xlu0 %830
    %v833 = vmul.f32 %v815, %v831
    %835 = vrot.lane.b32.xlu0 %v726, 32
    %v836 = vpop.permute.xlu0 %835
    %839 = vrot.lane.b32.xlu0 %v833, 64
    %v840 = vpop.permute.xlu0 %839
    %v842 = vsel %vm99, %v836, %v840
    %v844 = vsel %vm101, %v842, 0
    %846 = vmatprep.subr.mxu0 0.0
    %847 = vmatpush1.msra.mxu0 %v71
    %848 = vmatprep.subr.mxu0 0.0
    %849 = vmatpush1.msra.mxu0 %v72
    %850 = vmatprep.subr.mxu0 0.0
    %851 = vmatpush1.msra.mxu0 %v73
    %852 = vmatprep.subr.mxu0 0.0
    %853 = vmatpush1.msra.mxu0 %v74
    %854 = vmatprep.subr.mxu0 0.0
    %855 = vmatpush1.msra.mxu0 %v75
    %856 = vmatprep.subr.mxu0 0.0
    %857 = vmatpush1.msra.mxu0 %v76
    %858 = vmatprep.subr.mxu0 0.0
    %859 = vmatpush1.msra.mxu0 %v77
    %860 = vmatprep.subr.mxu0 0.0
    %861 = vmatpush1.msra.mxu0 %v78
    %862 = vmatprep.subr.mxu0 0.0
    %863 = vmatpush1.msra.mxu0 0.0
    %864 = vmatprep.subr.mxu0 0.0
    %865 = vmatpush1.msra.mxu0 0.0
    %866 = vmatprep.subr.mxu0 0.0
    %867 = vmatpush1.msra.mxu0 0.0
    %868 = vmatprep.subr.mxu0 0.0
    %869 = vmatpush1.msra.mxu0 0.0
    %870 = vmatprep.subr.mxu0 0.0
    %871 = vmatpush1.msra.mxu0 0.0
    %872 = vmatprep.subr.mxu0 0.0
    %873 = vmatpush1.msra.mxu0 0.0
    %874 = vmatprep.subr.mxu0 0.0
    %875 = vmatpush1.msra.mxu0 0.0
    %876 = vmatprep.subr.mxu0 0.0
    %877 = vmatpush1.msra.mxu0 0.0
    %878 = vmatprep.subr.mxu0 0.0
    %879 = vmatpush1.msra.mxu0 0.0
    %880 = vmatprep.subr.mxu0 0.0
    %881 = vmatpush1.msra.mxu0 0.0
    %882 = vmatprep.subr.mxu0 0.0
    %883 = vmatpush1.msra.mxu0 0.0
    %884 = vmatprep.subr.mxu0 0.0
    %885 = vmatpush1.msra.mxu0 0.0
    %886 = vmatprep.subr.mxu0 0.0
    %887 = vmatpush1.msra.mxu0 0.0
    %888 = vmatprep.subr.mxu0 0.0
    %889 = vmatpush1.msra.mxu0 0.0
    %890 = vmatprep.subr.mxu0 0.0
    %891 = vmatpush1.msra.mxu0 0.0
    %892 = vmatprep.subr.mxu0 0.0
    %893 = vmatpush1.msra.mxu0 0.0
    %894 = vmatprep.subr.mxu0 0.0
    %895 = vmatpush1.msra.mxu0 0.0
    %896 = vmatprep.subr.mxu0 0.0
    %897 = vmatpush1.msra.mxu0 0.0
    %898 = vmatprep.subr.mxu0 0.0
    %899 = vmatpush1.msra.mxu0 0.0
    %900 = vmatprep.subr.mxu0 0.0
    %901 = vmatpush1.msra.mxu0 0.0
    %902 = vmatprep.subr.mxu0 0.0
    %903 = vmatpush1.msra.mxu0 0.0
    %904 = vmatprep.subr.mxu0 0.0
    %905 = vmatpush1.msra.mxu0 0.0
    %906 = vmatprep.subr.mxu0 0.0
    %907 = vmatpush1.msra.mxu0 0.0
    %908 = vmatprep.subr.mxu0 0.0
    %909 = vmatpush1.msra.mxu0 0.0
    %910 = vmatprep.mubr.f32.mxu0 0.0
    %911 = vmatmul.mubr.f32.gmra.mrb[0].mxu0 %v844
    %v912 = vpop.f32.mrb[0].mxu0
    %v913 = vadd.f32 %v92, %v912
    %v914 = vpop.f32.mrb[0].mxu0
    %915 = vdwg.mxu0
    %v916 = vxor.u32 %v913, 2147483648
    %v917 = vmul.f32 %v916, 1.442695
    %v918 = vpow.pop %v917
    %v919 = vadd.f32 %v918, 1.0
    %v920 = vrcp.pop %v919
    %v921 = vmul.f32 1.0, %v920
    %v922 = vtanh.pop %v913
    %v923 = vmul.f32 %v921, %v720
    %925 = vrot.lane.b32.xlu0 %v922, 64
    %v926 = vpop.permute.xlu0 %925
    %v928 = vmul.f32 %v921, %v926
    %930 = vrot.lane.b32.xlu0 %v928, 32
    %v931 = vpop.permute.xlu0 %930
    %v933 = vadd.f32 %v923, %v931
    %v934 = vtanh.pop %v933
    %936 = vrot.lane.b32.xlu0 %v934, 64
    %v937 = vpop.permute.xlu0 %936
    %v939 = vmul.f32 %v921, %v937
    %s940 = scalar_lea.vmem [#allocation2], 8
    %v941 = vld [vmem:[%s940] sm:$0x3]
    %942 = vrot.lane.b32.xlu0 %v833, 32
    %v943 = vpop.permute.xlu0 %942
    %946 = vrot.lane.b32.xlu0 %v941, 32
    %v947 = vpop.permute.xlu0 %946
    %v949 = vsel %vm99, %v943, %v947
    %v951 = vsel %vm101, %v949, 0
    %953 = vmatprep.subr.mxu0 0.0
    %954 = vmatpush1.msra.mxu0 %v62
    %955 = vmatprep.subr.mxu0 0.0
    %956 = vmatpush1.msra.mxu0 %v63
    %957 = vmatprep.subr.mxu0 0.0
    %958 = vmatpush1.msra.mxu0 %v64
    %959 = vmatprep.subr.mxu0 0.0
    %960 = vmatpush1.msra.mxu0 %v65
    %961 = vmatprep.subr.mxu0 0.0
    %962 = vmatpush1.msra.mxu0 %v66
    %963 = vmatprep.subr.mxu0 0.0
    %964 = vmatpush1.msra.mxu0 %v67
    %965 = vmatprep.subr.mxu0 0.0
    %966 = vmatpush1.msra.mxu0 %v68
    %967 = vmatprep.subr.mxu0 0.0
    %968 = vmatpush1.msra.mxu0 %v69
    %969 = vmatprep.subr.mxu0 0.0
    %970 = vmatpush1.msra.mxu0 0.0
    %971 = vmatprep.subr.mxu0 0.0
    %972 = vmatpush1.msra.mxu0 0.0
    %973 = vmatprep.subr.mxu0 0.0
    %974 = vmatpush1.msra.mxu0 0.0
    %975 = vmatprep.subr.mxu0 0.0
    %976 = vmatpush1.msra.mxu0 0.0
    %977 = vmatprep.subr.mxu0 0.0
    %978 = vmatpush1.msra.mxu0 0.0
    %979 = vmatprep.subr.mxu0 0.0
    %980 = vmatpush1.msra.mxu0 0.0
    %981 = vmatprep.subr.mxu0 0.0
    %982 = vmatpush1.msra.mxu0 0.0
    %983 = vmatprep.subr.mxu0 0.0
    %984 = vmatpush1.msra.mxu0 0.0
    %985 = vmatprep.subr.mxu0 0.0
    %986 = vmatpush1.msra.mxu0 0.0
    %987 = vmatprep.subr.mxu0 0.0
    %988 = vmatpush1.msra.mxu0 0.0
    %989 = vmatprep.subr.mxu0 0.0
    %990 = vmatpush1.msra.mxu0 0.0
    %991 = vmatprep.subr.mxu0 0.0
    %992 = vmatpush1.msra.mxu0 0.0
    %993 = vmatprep.subr.mxu0 0.0
    %994 = vmatpush1.msra.mxu0 0.0
    %995 = vmatprep.subr.mxu0 0.0
    %996 = vmatpush1.msra.mxu0 0.0
    %997 = vmatprep.subr.mxu0 0.0
    %998 = vmatpush1.msra.mxu0 0.0
    %999 = vmatprep.subr.mxu0 0.0
    %1000 = vmatpush1.msra.mxu0 0.0
    %1001 = vmatprep.subr.mxu0 0.0
    %1002 = vmatpush1.msra.mxu0 0.0
    %1003 = vmatprep.subr.mxu0 0.0
    %1004 = vmatpush1.msra.mxu0 0.0
    %1005 = vmatprep.subr.mxu0 0.0
    %1006 = vmatpush1.msra.mxu0 0.0
    %1007 = vmatprep.subr.mxu0 0.0
    %1008 = vmatpush1.msra.mxu0 0.0
    %1009 = vmatprep.subr.mxu0 0.0
    %1010 = vmatpush1.msra.mxu0 0.0
    %1011 = vmatprep.subr.mxu0 0.0
    %1012 = vmatpush1.msra.mxu0 0.0
    %1013 = vmatprep.subr.mxu0 0.0
    %1014 = vmatpush1.msra.mxu0 0.0
    %1015 = vmatprep.subr.mxu0 0.0
    %1016 = vmatpush1.msra.mxu0 0.0
    %1017 = vmatprep.mubr.f32.mxu0 0.0
    %1018 = vmatmul.mubr.f32.gmra.mrb[0].mxu0 %v951
    %v1019 = vpop.f32.mrb[0].mxu0
    %v1020 = vadd.f32 %v84, %v1019
    %v1021 = vpop.f32.mrb[0].mxu0
    %1022 = vdwg.mxu0
    %v1023 = vxor.u32 %v1020, 2147483648
    %v1024 = vmul.f32 %v1023, 1.442695
    %v1025 = vpow.pop %v1024
    %v1026 = vadd.f32 %v1025, 1.0
    %v1027 = vrcp.pop %v1026
    %v1028 = vmul.f32 1.0, %v1027
    %v1029 = vtanh.pop %v1020
    %v1030 = vmul.f32 %v1028, %v827
    %1032 = vrot.lane.b32.xlu0 %v1029, 64
    %v1033 = vpop.permute.xlu0 %1032
    %v1035 = vmul.f32 %v1028, %v1033
    %1037 = vrot.lane.b32.xlu0 %v1035, 32
    %v1038 = vpop.permute.xlu0 %1037
    %v1040 = vadd.f32 %v1030, %v1038
    %v1041 = vtanh.pop %v1040
    %1043 = vrot.lane.b32.xlu0 %v1041, 64
    %v1044 = vpop.permute.xlu0 %1043
    %v1046 = vmul.f32 %v1028, %v1044
    %1048 = vrot.lane.b32.xlu0 %v939, 32
    %v1049 = vpop.permute.xlu0 %1048
    %1052 = vrot.lane.b32.xlu0 %v1046, 64
    %v1053 = vpop.permute.xlu0 %1052
    %v1055 = vsel %vm99, %v1049, %v1053
    %v1057 = vsel %vm101, %v1055, 0
    %1059 = vmatprep.subr.mxu0 0.0
    %1060 = vmatpush1.msra.mxu0 %v71
    %1061 = vmatprep.subr.mxu0 0.0
    %1062 = vmatpush1.msra.mxu0 %v72
    %1063 = vmatprep.subr.mxu0 0.0
    %1064 = vmatpush1.msra.mxu0 %v73
    %1065 = vmatprep.subr.mxu0 0.0
    %1066 = vmatpush1.msra.mxu0 %v74
    %1067 = vmatprep.subr.mxu0 0.0
    %1068 = vmatpush1.msra.mxu0 %v75
    %1069 = vmatprep.subr.mxu0 0.0
    %1070 = vmatpush1.msra.mxu0 %v76
    %1071 = vmatprep.subr.mxu0 0.0
    %1072 = vmatpush1.msra.mxu0 %v77
    %1073 = vmatprep.subr.mxu0 0.0
    %1074 = vmatpush1.msra.mxu0 %v78
    %1075 = vmatprep.subr.mxu0 0.0
    %1076 = vmatpush1.msra.mxu0 0.0
    %1077 = vmatprep.subr.mxu0 0.0
    %1078 = vmatpush1.msra.mxu0 0.0
    %1079 = vmatprep.subr.mxu0 0.0
    %1080 = vmatpush1.msra.mxu0 0.0
    %1081 = vmatprep.subr.mxu0 0.0
    %1082 = vmatpush1.msra.mxu0 0.0
    %1083 = vmatprep.subr.mxu0 0.0
    %1084 = vmatpush1.msra.mxu0 0.0
    %1085 = vmatprep.subr.mxu0 0.0
    %1086 = vmatpush1.msra.mxu0 0.0
    %1087 = vmatprep.subr.mxu0 0.0
    %1088 = vmatpush1.msra.mxu0 0.0
    %1089 = vmatprep.subr.mxu0 0.0
    %1090 = vmatpush1.msra.mxu0 0.0
    %1091 = vmatprep.subr.mxu0 0.0
    %1092 = vmatpush1.msra.mxu0 0.0
    %1093 = vmatprep.subr.mxu0 0.0
    %1094 = vmatpush1.msra.mxu0 0.0
    %1095 = vmatprep.subr.mxu0 0.0
    %1096 = vmatpush1.msra.mxu0 0.0
    %1097 = vmatprep.subr.mxu0 0.0
    %1098 = vmatpush1.msra.mxu0 0.0
    %1099 = vmatprep.subr.mxu0 0.0
    %1100 = vmatpush1.msra.mxu0 0.0
    %1101 = vmatprep.subr.mxu0 0.0
    %1102 = vmatpush1.msra.mxu0 0.0
    %1103 = vmatprep.subr.mxu0 0.0
    %1104 = vmatpush1.msra.mxu0 0.0
    %1105 = vmatprep.subr.mxu0 0.0
    %1106 = vmatpush1.msra.mxu0 0.0
    %1107 = vmatprep.subr.mxu0 0.0
    %1108 = vmatpush1.msra.mxu0 0.0
    %1109 = vmatprep.subr.mxu0 0.0
    %1110 = vmatpush1.msra.mxu0 0.0
    %1111 = vmatprep.subr.mxu0 0.0
    %1112 = vmatpush1.msra.mxu0 0.0
    %1113 = vmatprep.subr.mxu0 0.0
    %1114 = vmatpush1.msra.mxu0 0.0
    %1115 = vmatprep.subr.mxu0 0.0
    %1116 = vmatpush1.msra.mxu0 0.0
    %1117 = vmatprep.subr.mxu0 0.0
    %1118 = vmatpush1.msra.mxu0 0.0
    %1119 = vmatprep.subr.mxu0 0.0
    %1120 = vmatpush1.msra.mxu0 0.0
    %1121 = vmatprep.subr.mxu0 0.0
    %1122 = vmatpush1.msra.mxu0 0.0
    %1123 = vmatprep.mubr.f32.mxu0 0.0
    %1124 = vmatmul.mubr.f32.gmra.mrb[0].mxu0 %v1057
    %v1125 = vpop.f32.mrb[0].mxu0
    %v1126 = vadd.f32 %v92, %v1125
    %v1127 = vpop.f32.mrb[0].mxu0
    %1128 = vdwg.mxu0
    %v1129 = vxor.u32 %v1126, 2147483648
    %v1130 = vmul.f32 %v1129, 1.442695
    %v1131 = vpow.pop %v1130
    %v1132 = vadd.f32 %v1131, 1.0
    %v1133 = vrcp.pop %v1132
    %v1134 = vmul.f32 1.0, %v1133
    %v1135 = vtanh.pop %v1126
    %v1136 = vmul.f32 %v1134, %v933
    %1138 = vrot.lane.b32.xlu0 %v1135, 64
    %v1139 = vpop.permute.xlu0 %1138
    %v1141 = vmul.f32 %v1134, %v1139
    %1143 = vrot.lane.b32.xlu0 %v1141, 32
    %v1144 = vpop.permute.xlu0 %1143
    %v1146 = vadd.f32 %v1136, %v1144
    %v1147 = vtanh.pop %v1146
    %1149 = vrot.lane.b32.xlu0 %v1147, 64
    %v1150 = vpop.permute.xlu0 %1149
    %v1152 = vmul.f32 %v1134, %v1150
    %s1153 = scalar_lea.vmem [#allocation2], 10
    %v1154 = vld [vmem:[%s1153] sm:$0x3]
    %1155 = vrot.lane.b32.xlu0 %v1046, 32
    %v1156 = vpop.permute.xlu0 %1155
    %1159 = vrot.lane.b32.xlu0 %v1154, 32
    %v1160 = vpop.permute.xlu0 %1159
    %v1162 = vsel %vm99, %v1156, %v1160
    %v1164 = vsel %vm101, %v1162, 0
    %1166 = vmatprep.subr.mxu0 0.0
    %1167 = vmatpush1.msra.mxu0 %v62
    %1168 = vmatprep.subr.mxu0 0.0
    %1169 = vmatpush1.msra.mxu0 %v63
    %1170 = vmatprep.subr.mxu0 0.0
    %1171 = vmatpush1.msra.mxu0 %v64
    %1172 = vmatprep.subr.mxu0 0.0
    %1173 = vmatpush1.msra.mxu0 %v65
    %1174 = vmatprep.subr.mxu0 0.0
    %1175 = vmatpush1.msra.mxu0 %v66
    %1176 = vmatprep.subr.mxu0 0.0
    %1177 = vmatpush1.msra.mxu0 %v67
    %1178 = vmatprep.subr.mxu0 0.0
    %1179 = vmatpush1.msra.mxu0 %v68
    %1180 = vmatprep.subr.mxu0 0.0
    %1181 = vmatpush1.msra.mxu0 %v69
    %1182 = vmatprep.subr.mxu0 0.0
    %1183 = vmatpush1.msra.mxu0 0.0
    %1184 = vmatprep.subr.mxu0 0.0
    %1185 = vmatpush1.msra.mxu0 0.0
    %1186 = vmatprep.subr.mxu0 0.0
    %1187 = vmatpush1.msra.mxu0 0.0
    %1188 = vmatprep.subr.mxu0 0.0
    %1189 = vmatpush1.msra.mxu0 0.0
    %1190 = vmatprep.subr.mxu0 0.0
    %1191 = vmatpush1.msra.mxu0 0.0
    %1192 = vmatprep.subr.mxu0 0.0
    %1193 = vmatpush1.msra.mxu0 0.0
    %1194 = vmatprep.subr.mxu0 0.0
    %1195 = vmatpush1.msra.mxu0 0.0
    %1196 = vmatprep.subr.mxu0 0.0
    %1197 = vmatpush1.msra.mxu0 0.0
    %1198 = vmatprep.subr.mxu0 0.0
    %1199 = vmatpush1.msra.mxu0 0.0
    %1200 = vmatprep.subr.mxu0 0.0
    %1201 = vmatpush1.msra.mxu0 0.0
    %1202 = vmatprep.subr.mxu0 0.0
    %1203 = vmatpush1.msra.mxu0 0.0
    %1204 = vmatprep.subr.mxu0 0.0
    %1205 = vmatpush1.msra.mxu0 0.0
    %1206 = vmatprep.subr.mxu0 0.0
    %1207 = vmatpush1.msra.mxu0 0.0
    %1208 = vmatprep.subr.mxu0 0.0
    %1209 = vmatpush1.msra.mxu0 0.0
    %1210 = vmatprep.subr.mxu0 0.0
    %1211 = vmatpush1.msra.mxu0 0.0
    %1212 = vmatprep.subr.mxu0 0.0
    %1213 = vmatpush1.msra.mxu0 0.0
    %1214 = vmatprep.subr.mxu0 0.0
    %1215 = vmatpush1.msra.mxu0 0.0
    %1216 = vmatprep.subr.mxu0 0.0
    %1217 = vmatpush1.msra.mxu0 0.0
    %1218 = vmatprep.subr.mxu0 0.0
    %1219 = vmatpush1.msra.mxu0 0.0
    %1220 = vmatprep.subr.mxu0 0.0
    %1221 = vmatpush1.msra.mxu0 0.0
    %1222 = vmatprep.subr.mxu0 0.0
    %1223 = vmatpush1.msra.mxu0 0.0
    %1224 = vmatprep.subr.mxu0 0.0
    %1225 = vmatpush1.msra.mxu0 0.0
    %1226 = vmatprep.subr.mxu0 0.0
    %1227 = vmatpush1.msra.mxu0 0.0
    %1228 = vmatprep.subr.mxu0 0.0
    %1229 = vmatpush1.msra.mxu0 0.0
    %1230 = vmatprep.mubr.f32.mxu0 0.0
    %1231 = vmatmul.mubr.f32.gmra.mrb[0].mxu0 %v1164
    %v1232 = vpop.f32.mrb[0].mxu0
    %v1233 = vadd.f32 %v84, %v1232
    %v1234 = vpop.f32.mrb[0].mxu0
    %1235 = vdwg.mxu0
    %v1236 = vxor.u32 %v1233, 2147483648
    %v1237 = vmul.f32 %v1236, 1.442695
    %v1238 = vpow.pop %v1237
    %v1239 = vadd.f32 %v1238, 1.0
    %v1240 = vrcp.pop %v1239
    %v1241 = vmul.f32 1.0, %v1240
    %v1242 = vtanh.pop %v1233
    %v1243 = vmul.f32 %v1241, %v1040
    %1245 = vrot.lane.b32.xlu0 %v1242, 64
    %v1246 = vpop.permute.xlu0 %1245
    %v1248 = vmul.f32 %v1241, %v1246
    %1250 = vrot.lane.b32.xlu0 %v1248, 32
    %v1251 = vpop.permute.xlu0 %1250
    %v1253 = vadd.f32 %v1243, %v1251
    %v1254 = vtanh.pop %v1253
    %1256 = vrot.lane.b32.xlu0 %v1254, 64
    %v1257 = vpop.permute.xlu0 %1256
    %v1259 = vmul.f32 %v1241, %v1257
    %1261 = vrot.lane.b32.xlu0 %v1152, 32
    %v1262 = vpop.permute.xlu0 %1261
    %1265 = vrot.lane.b32.xlu0 %v1259, 64
    %v1266 = vpop.permute.xlu0 %1265
    %v1268 = vsel %vm99, %v1262, %v1266
    %v1270 = vsel %vm101, %v1268, 0
    %1272 = vmatprep.subr.mxu0 0.0
    %1273 = vmatpush1.msra.mxu0 %v71
    %1274 = vmatprep.subr.mxu0 0.0
    %1275 = vmatpush1.msra.mxu0 %v72
    %1276 = vmatprep.subr.mxu0 0.0
    %1277 = vmatpush1.msra.mxu0 %v73
    %1278 = vmatprep.subr.mxu0 0.0
    %1279 = vmatpush1.msra.mxu0 %v74
    %1280 = vmatprep.subr.mxu0 0.0
    %1281 = vmatpush1.msra.mxu0 %v75
    %1282 = vmatprep.subr.mxu0 0.0
    %1283 = vmatpush1.msra.mxu0 %v76
    %1284 = vmatprep.subr.mxu0 0.0
    %1285 = vmatpush1.msra.mxu0 %v77
    %1286 = vmatprep.subr.mxu0 0.0
    %1287 = vmatpush1.msra.mxu0 %v78
    %1288 = vmatprep.subr.mxu0 0.0
    %1289 = vmatpush1.msra.mxu0 0.0
    %1290 = vmatprep.subr.mxu0 0.0
    %1291 = vmatpush1.msra.mxu0 0.0
    %1292 = vmatprep.subr.mxu0 0.0
    %1293 = vmatpush1.msra.mxu0 0.0
    %1294 = vmatprep.subr.mxu0 0.0
    %1295 = vmatpush1.msra.mxu0 0.0
    %1296 = vmatprep.subr.mxu0 0.0
    %1297 = vmatpush1.msra.mxu0 0.0
    %1298 = vmatprep.subr.mxu0 0.0
    %1299 = vmatpush1.msra.mxu0 0.0
    %1300 = vmatprep.subr.mxu0 0.0
    %1301 = vmatpush1.msra.mxu0 0.0
    %1302 = vmatprep.subr.mxu0 0.0
    %1303 = vmatpush1.msra.mxu0 0.0
    %1304 = vmatprep.subr.mxu0 0.0
    %1305 = vmatpush1.msra.mxu0 0.0
    %1306 = vmatprep.subr.mxu0 0.0
    %1307 = vmatpush1.msra.mxu0 0.0
    %1308 = vmatprep.subr.mxu0 0.0
    %1309 = vmatpush1.msra.mxu0 0.0
    %1310 = vmatprep.subr.mxu0 0.0
    %1311 = vmatpush1.msra.mxu0 0.0
    %1312 = vmatprep.subr.mxu0 0.0
    %1313 = vmatpush1.msra.mxu0 0.0
    %1314 = vmatprep.subr.mxu0 0.0
    %1315 = vmatpush1.msra.mxu0 0.0
    %1316 = vmatprep.subr.mxu0 0.0
    %1317 = vmatpush1.msra.mxu0 0.0
    %1318 = vmatprep.subr.mxu0 0.0
    %1319 = vmatpush1.msra.mxu0 0.0
    %1320 = vmatprep.subr.mxu0 0.0
    %1321 = vmatpush1.msra.mxu0 0.0
    %1322 = vmatprep.subr.mxu0 0.0
    %1323 = vmatpush1.msra.mxu0 0.0
    %1324 = vmatprep.subr.mxu0 0.0
    %1325 = vmatpush1.msra.mxu0 0.0
    %1326 = vmatprep.subr.mxu0 0.0
    %1327 = vmatpush1.msra.mxu0 0.0
    %1328 = vmatprep.subr.mxu0 0.0
    %1329 = vmatpush1.msra.mxu0 0.0
    %1330 = vmatprep.subr.mxu0 0.0
    %1331 = vmatpush1.msra.mxu0 0.0
    %1332 = vmatprep.subr.mxu0 0.0
    %1333 = vmatpush1.msra.mxu0 0.0
    %1334 = vmatprep.subr.mxu0 0.0
    %1335 = vmatpush1.msra.mxu0 0.0
    %1336 = vmatprep.mubr.f32.mxu0 0.0
    %1337 = vmatmul.mubr.f32.gmra.mrb[0].mxu0 %v1270
    %v1338 = vpop.f32.mrb[0].mxu0
    %v1339 = vadd.f32 %v92, %v1338
    %v1340 = vpop.f32.mrb[0].mxu0
    %1341 = vdwg.mxu0
    %v1342 = vxor.u32 %v1339, 2147483648
    %v1343 = vmul.f32 %v1342, 1.442695
    %v1344 = vpow.pop %v1343
    %v1345 = vadd.f32 %v1344, 1.0
    %v1346 = vrcp.pop %v1345
    %v1347 = vmul.f32 1.0, %v1346
    %v1348 = vtanh.pop %v1339
    %v1349 = vmul.f32 %v1347, %v1146
    %1351 = vrot.lane.b32.xlu0 %v1348, 64
    %v1352 = vpop.permute.xlu0 %1351
    %v1354 = vmul.f32 %v1347, %v1352
    %1356 = vrot.lane.b32.xlu0 %v1354, 32
    %v1357 = vpop.permute.xlu0 %1356
    %v1359 = vadd.f32 %v1349, %v1357
    %v1360 = vtanh.pop %v1359
    %1362 = vrot.lane.b32.xlu0 %v1360, 64
    %v1363 = vpop.permute.xlu0 %1362
    %v1365 = vmul.f32 %v1347, %v1363
    %s1366 = scalar_lea.vmem [#allocation2], 12
    %v1367 = vld [vmem:[%s1366] sm:$0x3]
    %1368 = vrot.lane.b32.xlu0 %v1259, 32
    %v1369 = vpop.permute.xlu0 %1368
    %1372 = vrot.lane.b32.xlu0 %v1367, 32
    %v1373 = vpop.permute.xlu0 %1372
    %v1375 = vsel %vm99, %v1369, %v1373
    %v1377 = vsel %vm101, %v1375, 0
    %1379 = vmatprep.subr.mxu0 0.0
    %1380 = vmatpush1.msra.mxu0 %v62
    %1381 = vmatprep.subr.mxu0 0.0
    %1382 = vmatpush1.msra.mxu0 %v63
    %1383 = vmatprep.subr.mxu0 0.0
    %1384 = vmatpush1.msra.mxu0 %v64
    %1385 = vmatprep.subr.mxu0 0.0
    %1386 = vmatpush1.msra.mxu0 %v65
    %1387 = vmatprep.subr.mxu0 0.0
    %1388 = vmatpush1.msra.mxu0 %v66
    %1389 = vmatprep.subr.mxu0 0.0
    %1390 = vmatpush1.msra.mxu0 %v67
    %1391 = vmatprep.subr.mxu0 0.0
    %1392 = vmatpush1.msra.mxu0 %v68
    %1393 = vmatprep.subr.mxu0 0.0
    %1394 = vmatpush1.msra.mxu0 %v69
    %1395 = vmatprep.subr.mxu0 0.0
    %1396 = vmatpush1.msra.mxu0 0.0
    %1397 = vmatprep.subr.mxu0 0.0
    %1398 = vmatpush1.msra.mxu0 0.0
    %1399 = vmatprep.subr.mxu0 0.0
    %1400 = vmatpush1.msra.mxu0 0.0
    %1401 = vmatprep.subr.mxu0 0.0
    %1402 = vmatpush1.msra.mxu0 0.0
    %1403 = vmatprep.subr.mxu0 0.0
    %1404 = vmatpush1.msra.mxu0 0.0
    %1405 = vmatprep.subr.mxu0 0.0
    %1406 = vmatpush1.msra.mxu0 0.0
    %1407 = vmatprep.subr.mxu0 0.0
    %1408 = vmatpush1.msra.mxu0 0.0
    %1409 = vmatprep.subr.mxu0 0.0
    %1410 = vmatpush1.msra.mxu0 0.0
    %1411 = vmatprep.subr.mxu0 0.0
    %1412 = vmatpush1.msra.mxu0 0.0
    %1413 = vmatprep.subr.mxu0 0.0
    %1414 = vmatpush1.msra.mxu0 0.0
    %1415 = vmatprep.subr.mxu0 0.0
    %1416 = vmatpush1.msra.mxu0 0.0
    %1417 = vmatprep.subr.mxu0 0.0
    %1418 = vmatpush1.msra.mxu0 0.0
    %1419 = vmatprep.subr.mxu0 0.0
    %1420 = vmatpush1.msra.mxu0 0.0
    %1421 = vmatprep.subr.mxu0 0.0
    %1422 = vmatpush1.msra.mxu0 0.0
    %1423 = vmatprep.subr.mxu0 0.0
    %1424 = vmatpush1.msra.mxu0 0.0
    %1425 = vmatprep.subr.mxu0 0.0
    %1426 = vmatpush1.msra.mxu0 0.0
    %1427 = vmatprep.subr.mxu0 0.0
    %1428 = vmatpush1.msra.mxu0 0.0
    %1429 = vmatprep.subr.mxu0 0.0
    %1430 = vmatpush1.msra.mxu0 0.0
    %1431 = vmatprep.subr.mxu0 0.0
    %1432 = vmatpush1.msra.mxu0 0.0
    %1433 = vmatprep.subr.mxu0 0.0
    %1434 = vmatpush1.msra.mxu0 0.0
    %1435 = vmatprep.subr.mxu0 0.0
    %1436 = vmatpush1.msra.mxu0 0.0
    %1437 = vmatprep.subr.mxu0 0.0
    %1438 = vmatpush1.msra.mxu0 0.0
    %1439 = vmatprep.subr.mxu0 0.0
    %1440 = vmatpush1.msra.mxu0 0.0
    %1441 = vmatprep.subr.mxu0 0.0
    %1442 = vmatpush1.msra.mxu0 0.0
    %1443 = vmatprep.mubr.f32.mxu0 0.0
    %1444 = vmatmul.mubr.f32.gmra.mrb[0].mxu0 %v1377
    %v1445 = vpop.f32.mrb[0].mxu0
    %v1446 = vadd.f32 %v84, %v1445
    %v1447 = vpop.f32.mrb[0].mxu0
    %1448 = vdwg.mxu0
    %v1449 = vxor.u32 %v1446, 2147483648
    %v1450 = vmul.f32 %v1449, 1.442695
    %v1451 = vpow.pop %v1450
    %v1452 = vadd.f32 %v1451, 1.0
    %v1453 = vrcp.pop %v1452
    %v1454 = vmul.f32 1.0, %v1453
    %v1455 = vtanh.pop %v1446
    %v1456 = vmul.f32 %v1454, %v1253
    %1458 = vrot.lane.b32.xlu0 %v1455, 64
    %v1459 = vpop.permute.xlu0 %1458
    %v1461 = vmul.f32 %v1454, %v1459
    %1463 = vrot.lane.b32.xlu0 %v1461, 32
    %v1464 = vpop.permute.xlu0 %1463
    %v1466 = vadd.f32 %v1456, %v1464
    %v1467 = vtanh.pop %v1466
    %1469 = vrot.lane.b32.xlu0 %v1467, 64
    %v1470 = vpop.permute.xlu0 %1469
    %v1472 = vmul.f32 %v1454, %v1470
    %1474 = vrot.lane.b32.xlu0 %v1365, 32
    %v1475 = vpop.permute.xlu0 %1474
    %1478 = vrot.lane.b32.xlu0 %v1472, 64
    %v1479 = vpop.permute.xlu0 %1478
    %v1481 = vsel %vm99, %v1475, %v1479
    %v1483 = vsel %vm101, %v1481, 0
    %1485 = vmatprep.subr.mxu0 0.0
    %1486 = vmatpush1.msra.mxu0 %v71
    %1487 = vmatprep.subr.mxu0 0.0
    %1488 = vmatpush1.msra.mxu0 %v72
    %1489 = vmatprep.subr.mxu0 0.0
    %1490 = vmatpush1.msra.mxu0 %v73
    %1491 = vmatprep.subr.mxu0 0.0
    %1492 = vmatpush1.msra.mxu0 %v74
    %1493 = vmatprep.subr.mxu0 0.0
    %1494 = vmatpush1.msra.mxu0 %v75
    %1495 = vmatprep.subr.mxu0 0.0
    %1496 = vmatpush1.msra.mxu0 %v76
    %1497 = vmatprep.subr.mxu0 0.0
    %1498 = vmatpush1.msra.mxu0 %v77
    %1499 = vmatprep.subr.mxu0 0.0
    %1500 = vmatpush1.msra.mxu0 %v78
    %1501 = vmatprep.subr.mxu0 0.0
    %1502 = vmatpush1.msra.mxu0 0.0
    %1503 = vmatprep.subr.mxu0 0.0
    %1504 = vmatpush1.msra.mxu0 0.0
    %1505 = vmatprep.subr.mxu0 0.0
    %1506 = vmatpush1.msra.mxu0 0.0
    %1507 = vmatprep.subr.mxu0 0.0
    %1508 = vmatpush1.msra.mxu0 0.0
    %1509 = vmatprep.subr.mxu0 0.0
    %1510 = vmatpush1.msra.mxu0 0.0
    %1511 = vmatprep.subr.mxu0 0.0
    %1512 = vmatpush1.msra.mxu0 0.0
    %1513 = vmatprep.subr.mxu0 0.0
    %1514 = vmatpush1.msra.mxu0 0.0
    %1515 = vmatprep.subr.mxu0 0.0
    %1516 = vmatpush1.msra.mxu0 0.0
    %1517 = vmatprep.subr.mxu0 0.0
    %1518 = vmatpush1.msra.mxu0 0.0
    %1519 = vmatprep.subr.mxu0 0.0
    %1520 = vmatpush1.msra.mxu0 0.0
    %1521 = vmatprep.subr.mxu0 0.0
    %1522 = vmatpush1.msra.mxu0 0.0
    %1523 = vmatprep.subr.mxu0 0.0
    %1524 = vmatpush1.msra.mxu0 0.0
    %1525 = vmatprep.subr.mxu0 0.0
    %1526 = vmatpush1.msra.mxu0 0.0
    %1527 = vmatprep.subr.mxu0 0.0
    %1528 = vmatpush1.msra.mxu0 0.0
    %1529 = vmatprep.subr.mxu0 0.0
    %1530 = vmatpush1.msra.mxu0 0.0
    %1531 = vmatprep.subr.mxu0 0.0
    %1532 = vmatpush1.msra.mxu0 0.0
    %1533 = vmatprep.subr.mxu0 0.0
    %1534 = vmatpush1.msra.mxu0 0.0
    %1535 = vmatprep.subr.mxu0 0.0
    %1536 = vmatpush1.msra.mxu0 0.0
    %1537 = vmatprep.subr.mxu0 0.0
    %1538 = vmatpush1.msra.mxu0 0.0
    %1539 = vmatprep.subr.mxu0 0.0
    %1540 = vmatpush1.msra.mxu0 0.0
    %1541 = vmatprep.subr.mxu0 0.0
    %1542 = vmatpush1.msra.mxu0 0.0
    %1543 = vmatprep.subr.mxu0 0.0
    %1544 = vmatpush1.msra.mxu0 0.0
    %1545 = vmatprep.subr.mxu0 0.0
    %1546 = vmatpush1.msra.mxu0 0.0
    %1547 = vmatprep.subr.mxu0 0.0
    %1548 = vmatpush1.msra.mxu0 0.0
    %1549 = vmatprep.mubr.f32.mxu0 0.0
    %1550 = vmatmul.mubr.f32.gmra.mrb[0].mxu0 %v1483
    %v1551 = vpop.f32.mrb[0].mxu0
    %v1552 = vadd.f32 %v92, %v1551
    %v1553 = vpop.f32.mrb[0].mxu0
    %1554 = vdwg.mxu0
    %v1555 = vxor.u32 %v1552, 2147483648
    %v1556 = vmul.f32 %v1555, 1.442695
    %v1557 = vpow.pop %v1556
    %v1558 = vadd.f32 %v1557, 1.0
    %v1559 = vrcp.pop %v1558
    %v1560 = vmul.f32 1.0, %v1559
    %v1561 = vtanh.pop %v1552
    %v1562 = vmul.f32 %v1560, %v1359
    %1564 = vrot.lane.b32.xlu0 %v1561, 64
    %v1565 = vpop.permute.xlu0 %1564
    %v1567 = vmul.f32 %v1560, %v1565
    %1569 = vrot.lane.b32.xlu0 %v1567, 32
    %v1570 = vpop.permute.xlu0 %1569
    %v1572 = vadd.f32 %v1562, %v1570
    %v1573 = vtanh.pop %v1572
    %1575 = vrot.lane.b32.xlu0 %v1573, 64
    %v1576 = vpop.permute.xlu0 %1575
    %v1578 = vmul.f32 %v1560, %v1576
    %s1579 = scalar_lea.vmem [#allocation2], 14
    %v1580 = vld [vmem:[%s1579] sm:$0x3]
    %1581 = vrot.lane.b32.xlu0 %v1472, 32
    %v1582 = vpop.permute.xlu0 %1581
    %1585 = vrot.lane.b32.xlu0 %v1580, 32
    %v1586 = vpop.permute.xlu0 %1585
    %v1588 = vsel %vm99, %v1582, %v1586
    %v1590 = vsel %vm101, %v1588, 0
    %1592 = vmatprep.subr.mxu0 0.0
    %1593 = vmatpush1.msra.mxu0 %v62
    %1594 = vmatprep.subr.mxu0 0.0
    %1595 = vmatpush1.msra.mxu0 %v63
    %1596 = vmatprep.subr.mxu0 0.0
    %1597 = vmatpush1.msra.mxu0 %v64
    %1598 = vmatprep.subr.mxu0 0.0
    %1599 = vmatpush1.msra.mxu0 %v65
    %1600 = vmatprep.subr.mxu0 0.0
    %1601 = vmatpush1.msra.mxu0 %v66
    %1602 = vmatprep.subr.mxu0 0.0
    %1603 = vmatpush1.msra.mxu0 %v67
    %1604 = vmatprep.subr.mxu0 0.0
    %1605 = vmatpush1.msra.mxu0 %v68
    %1606 = vmatprep.subr.mxu0 0.0
    %1607 = vmatpush1.msra.mxu0 %v69
    %1608 = vmatprep.subr.mxu0 0.0
    %1609 = vmatpush1.msra.mxu0 0.0
    %1610 = vmatprep.subr.mxu0 0.0
    %1611 = vmatpush1.msra.mxu0 0.0
    %1612 = vmatprep.subr.mxu0 0.0
    %1613 = vmatpush1.msra.mxu0 0.0
    %1614 = vmatprep.subr.mxu0 0.0
    %1615 = vmatpush1.msra.mxu0 0.0
    %1616 = vmatprep.subr.mxu0 0.0
    %1617 = vmatpush1.msra.mxu0 0.0
    %1618 = vmatprep.subr.mxu0 0.0
    %1619 = vmatpush1.msra.mxu0 0.0
    %1620 = vmatprep.subr.mxu0 0.0
    %1621 = vmatpush1.msra.mxu0 0.0
    %1622 = vmatprep.subr.mxu0 0.0
    %1623 = vmatpush1.msra.mxu0 0.0
    %1624 = vmatprep.subr.mxu0 0.0
    %1625 = vmatpush1.msra.mxu0 0.0
    %1626 = vmatprep.subr.mxu0 0.0
    %1627 = vmatpush1.msra.mxu0 0.0
    %1628 = vmatprep.subr.mxu0 0.0
    %1629 = vmatpush1.msra.mxu0 0.0
    %1630 = vmatprep.subr.mxu0 0.0
    %1631 = vmatpush1.msra.mxu0 0.0
    %1632 = vmatprep.subr.mxu0 0.0
    %1633 = vmatpush1.msra.mxu0 0.0
    %1634 = vmatprep.subr.mxu0 0.0
    %1635 = vmatpush1.msra.mxu0 0.0
    %1636 = vmatprep.subr.mxu0 0.0
    %1637 = vmatpush1.msra.mxu0 0.0
    %1638 = vmatprep.subr.mxu0 0.0
    %1639 = vmatpush1.msra.mxu0 0.0
    %1640 = vmatprep.subr.mxu0 0.0
    %1641 = vmatpush1.msra.mxu0 0.0
    %1642 = vmatprep.subr.mxu0 0.0
    %1643 = vmatpush1.msra.mxu0 0.0
    %1644 = vmatprep.subr.mxu0 0.0
    %1645 = vmatpush1.msra.mxu0 0.0
    %1646 = vmatprep.subr.mxu0 0.0
    %1647 = vmatpush1.msra.mxu0 0.0
    %1648 = vmatprep.subr.mxu0 0.0
    %1649 = vmatpush1.msra.mxu0 0.0
    %1650 = vmatprep.subr.mxu0 0.0
    %1651 = vmatpush1.msra.mxu0 0.0
    %1652 = vmatprep.subr.mxu0 0.0
    %1653 = vmatpush1.msra.mxu0 0.0
    %1654 = vmatprep.subr.mxu0 0.0
    %1655 = vmatpush1.msra.mxu0 0.0
    %1656 = vmatprep.mubr.f32.mxu0 0.0
    %1657 = vmatmul.mubr.f32.gmra.mrb[0].mxu0 %v1590
    %v1658 = vpop.f32.mrb[0].mxu0
    %v1659 = vadd.f32 %v84, %v1658
    %v1660 = vpop.f32.mrb[0].mxu0
    %1661 = vdwg.mxu0
    %v1662 = vxor.u32 %v1659, 2147483648
    %v1663 = vmul.f32 %v1662, 1.442695
    %v1664 = vpow.pop %v1663
    %v1665 = vadd.f32 %v1664, 1.0
    %v1666 = vrcp.pop %v1665
    %v1667 = vmul.f32 1.0, %v1666
    %v1668 = vtanh.pop %v1659
    %v1669 = vmul.f32 %v1667, %v1466
    %1671 = vrot.lane.b32.xlu0 %v1668, 64
    %v1672 = vpop.permute.xlu0 %1671
    %v1674 = vmul.f32 %v1667, %v1672
    %1676 = vrot.lane.b32.xlu0 %v1674, 32
    %v1677 = vpop.permute.xlu0 %1676
    %v1679 = vadd.f32 %v1669, %v1677
    %v1680 = vtanh.pop %v1679
    %1682 = vrot.lane.b32.xlu0 %v1680, 64
    %v1683 = vpop.permute.xlu0 %1682
    %v1685 = vmul.f32 %v1667, %v1683
    %1687 = vrot.lane.b32.xlu0 %v1578, 32
    %v1688 = vpop.permute.xlu0 %1687
    %1691 = vrot.lane.b32.xlu0 %v1685, 64
    %v1692 = vpop.permute.xlu0 %1691
    %v1694 = vsel %vm99, %v1688, %v1692
    %v1696 = vsel %vm101, %v1694, 0
    %1698 = vmatprep.subr.mxu0 0.0
    %1699 = vmatpush1.msra.mxu0 %v71
    %1700 = vmatprep.subr.mxu0 0.0
    %1701 = vmatpush1.msra.mxu0 %v72
    %1702 = vmatprep.subr.mxu0 0.0
    %1703 = vmatpush1.msra.mxu0 %v73
    %1704 = vmatprep.subr.mxu0 0.0
    %1705 = vmatpush1.msra.mxu0 %v74
    %1706 = vmatprep.subr.mxu0 0.0
    %1707 = vmatpush1.msra.mxu0 %v75
    %1708 = vmatprep.subr.mxu0 0.0
    %1709 = vmatpush1.msra.mxu0 %v76
    %1710 = vmatprep.subr.mxu0 0.0
    %1711 = vmatpush1.msra.mxu0 %v77
    %1712 = vmatprep.subr.mxu0 0.0
    %1713 = vmatpush1.msra.mxu0 %v78
    %1714 = vmatprep.subr.mxu0 0.0
    %1715 = vmatpush1.msra.mxu0 0.0
    %1716 = vmatprep.subr.mxu0 0.0
    %1717 = vmatpush1.msra.mxu0 0.0
    %1718 = vmatprep.subr.mxu0 0.0
    %1719 = vmatpush1.msra.mxu0 0.0
    %1720 = vmatprep.subr.mxu0 0.0
    %1721 = vmatpush1.msra.mxu0 0.0
    %1722 = vmatprep.subr.mxu0 0.0
    %1723 = vmatpush1.msra.mxu0 0.0
    %1724 = vmatprep.subr.mxu0 0.0
    %1725 = vmatpush1.msra.mxu0 0.0
    %1726 = vmatprep.subr.mxu0 0.0
    %1727 = vmatpush1.msra.mxu0 0.0
    %1728 = vmatprep.subr.mxu0 0.0
    %1729 = vmatpush1.msra.mxu0 0.0
    %1730 = vmatprep.subr.mxu0 0.0
    %1731 = vmatpush1.msra.mxu0 0.0
    %1732 = vmatprep.subr.mxu0 0.0
    %1733 = vmatpush1.msra.mxu0 0.0
    %1734 = vmatprep.subr.mxu0 0.0
    %1735 = vmatpush1.msra.mxu0 0.0
    %1736 = vmatprep.subr.mxu0 0.0
    %1737 = vmatpush1.msra.mxu0 0.0
    %1738 = vmatprep.subr.mxu0 0.0
    %1739 = vmatpush1.msra.mxu0 0.0
    %1740 = vmatprep.subr.mxu0 0.0
    %1741 = vmatpush1.msra.mxu0 0.0
    %1742 = vmatprep.subr.mxu0 0.0
    %1743 = vmatpush1.msra.mxu0 0.0
    %1744 = vmatprep.subr.mxu0 0.0
    %1745 = vmatpush1.msra.mxu0 0.0
    %1746 = vmatprep.subr.mxu0 0.0
    %1747 = vmatpush1.msra.mxu0 0.0
    %1748 = vmatprep.subr.mxu0 0.0
    %1749 = vmatpush1.msra.mxu0 0.0
    %1750 = vmatprep.subr.mxu0 0.0
    %1751 = vmatpush1.msra.mxu0 0.0
    %1752 = vmatprep.subr.mxu0 0.0
    %1753 = vmatpush1.msra.mxu0 0.0
    %1754 = vmatprep.subr.mxu0 0.0
    %1755 = vmatpush1.msra.mxu0 0.0
    %1756 = vmatprep.subr.mxu0 0.0
    %1757 = vmatpush1.msra.mxu0 0.0
    %1758 = vmatprep.subr.mxu0 0.0
    %1759 = vmatpush1.msra.mxu0 0.0
    %1760 = vmatprep.subr.mxu0 0.0
    %1761 = vmatpush1.msra.mxu0 0.0
    %1762 = vmatprep.mubr.f32.mxu0 0.0
    %1763 = vmatmul.mubr.f32.gmra.mrb[0].mxu0 %v1696
    %v1764 = vpop.f32.mrb[0].mxu0
    %v1765 = vadd.f32 %v92, %v1764
    %v1766 = vpop.f32.mrb[0].mxu0
    %1767 = vdwg.mxu0
    %v1768 = vxor.u32 %v1765, 2147483648
    %v1769 = vmul.f32 %v1768, 1.442695
    %v1770 = vpow.pop %v1769
    %v1771 = vadd.f32 %v1770, 1.0
    %v1772 = vrcp.pop %v1771
    %v1773 = vmul.f32 1.0, %v1772
    %v1774 = vtanh.pop %v1765
    %v1775 = vmul.f32 %v1773, %v1572
    %1777 = vrot.lane.b32.xlu0 %v1774, 64
    %v1778 = vpop.permute.xlu0 %1777
    %v1780 = vmul.f32 %v1773, %v1778
    %1782 = vrot.lane.b32.xlu0 %v1780, 32
    %v1783 = vpop.permute.xlu0 %1782
    %v1785 = vadd.f32 %v1775, %v1783
    %v1786 = vtanh.pop %v1785
    %1788 = vrot.lane.b32.xlu0 %v1786, 64
    %v1789 = vpop.permute.xlu0 %1788
    %v1791 = vmul.f32 %v1773, %v1789
    %1792 = vrot.lane.b32.xlu0 %v513, 64
    %v1793 = vpop.permute.xlu0 %1792
    %1795 = vrot.lane.b32.xlu0 %v726, 96
    %v1796 = vpop.permute.xlu0 %1795
    %1798 = vrot.lane.b32.xlu0 %v1365, 64
    %v1799 = vpop.permute.xlu0 %1798
    %1801 = vrot.lane.b32.xlu0 %v1578, 96
    %v1802 = vpop.permute.xlu0 %1801
    %v1804 = vsel %vm99, %v410, %v1793
    %v1805 = vsel %vm101, %v1804, %v1796
    %vm1806 = vcmask 785408
    %v1807 = vsel %vm1806, %v1805, %v939
    %v1808 = vsel %vm99, %v1262, %v1799
    %v1809 = vsel %vm101, %v1808, %v1802
    %v1810 = vsel %vm1806, %v1809, %v1791
    %v1811 = vld [vmem:[#allocation7] sm:$0xff]
    %v1812 = vld [vmem:[#allocation7 + $0x8] sm:$0xff]
    %v1813 = vld [vmem:[#allocation7 + $0x10] sm:$0xff]
    %v1814 = vld [vmem:[#allocation7 + $0x18] sm:$0xff]
    %v1815 = vld [vmem:[#allocation7 + $0x20] sm:$0xff]
    %v1816 = vld [vmem:[#allocation7 + $0x28] sm:$0xff]
    %v1817 = vld [vmem:[#allocation7 + $0x30] sm:$0xff]
    %v1818 = vld [vmem:[#allocation7 + $0x38] sm:$0xff]
    %v1819 = vld [vmem:[#allocation7 + $0x40] sm:$0xff]
    %v1820 = vld [vmem:[#allocation7 + $0x48] sm:$0xff]
    %v1821 = vld [vmem:[#allocation7 + $0x50] sm:$0xff]
    %v1822 = vld [vmem:[#allocation7 + $0x58] sm:$0xff]
    %v1823 = vld [vmem:[#allocation7 + $0x60] sm:$0xff]
    %v1824 = vld [vmem:[#allocation7 + $0x68] sm:$0xff]
    %v1825 = vld [vmem:[#allocation7 + $0x70] sm:$0xff]
    %v1826 = vld [vmem:[#allocation7 + $0x78] sm:$0xff]
    %v1827 = vld [vmem:[#allocation7 + $0x80] sm:$0xff]
    %v1828 = vld [vmem:[#allocation7 + $0x88] sm:$0xff]
    %v1829 = vld [vmem:[#allocation7 + $0x90] sm:$0xff]
    %v1830 = vld [vmem:[#allocation7 + $0x98] sm:$0xff]
    %v1831 = vld [vmem:[#allocation7 + $0xa0] sm:$0xff]
    %v1832 = vld [vmem:[#allocation7 + $0xa8] sm:$0xff]
    %v1833 = vld [vmem:[#allocation7 + $0xb0] sm:$0xff]
    %v1834 = vld [vmem:[#allocation7 + $0xb8] sm:$0xff]
    %v1835 = vld [vmem:[#allocation7 + $0xc0] sm:$0xff]
    %v1836 = vld [vmem:[#allocation7 + $0xc8] sm:$0xff]
    %v1837 = vld [vmem:[#allocation7 + $0xd0] sm:$0xff]
    %v1838 = vld [vmem:[#allocation7 + $0xd8] sm:$0xff]
    %v1839 = vld [vmem:[#allocation7 + $0xe0] sm:$0xff]
    %v1840 = vld [vmem:[#allocation7 + $0xe8] sm:$0xff]
    %v1841 = vld [vmem:[#allocation7 + $0xf0] sm:$0xff]
    %v1842 = vld [vmem:[#allocation7 + $0xf8] sm:$0xff]
    %v1843 = vld [vmem:[%s4] sm:$0x1]
    %v1845 = vlaneseq
    %v1846 = vshrl.u32 %v1845, 7
    %v1847 = vsub.s32 0, %v1846
    %v1848 = vrot.slane %v1843, %v1847
    %1850 = vmatprep.subr.mxu0 0.0
    %1851 = vmatpush1.msra.mxu0 %v1811
    %1852 = vmatprep.subr.mxu0 0.0
    %1853 = vmatpush1.msra.mxu0 %v1812
    %1854 = vmatprep.subr.mxu0 0.0
    %1855 = vmatpush1.msra.mxu0 %v1813
    %1856 = vmatprep.subr.mxu0 0.0
    %1857 = vmatpush1.msra.mxu0 %v1814
    %1858 = vmatprep.subr.mxu0 0.0
    %1859 = vmatpush1.msra.mxu0 %v1815
    %1860 = vmatprep.subr.mxu0 0.0
    %1861 = vmatpush1.msra.mxu0 %v1816
    %1862 = vmatprep.subr.mxu0 0.0
    %1863 = vmatpush1.msra.mxu0 %v1817
    %1864 = vmatprep.subr.mxu0 0.0
    %1865 = vmatpush1.msra.mxu0 %v1818
    %1866 = vmatprep.subr.mxu0 0.0
    %1867 = vmatpush1.msra.mxu0 %v1819
    %1868 = vmatprep.subr.mxu0 0.0
    %1869 = vmatpush1.msra.mxu0 %v1820
    %1870 = vmatprep.subr.mxu0 0.0
    %1871 = vmatpush1.msra.mxu0 %v1821
    %1872 = vmatprep.subr.mxu0 0.0
    %1873 = vmatpush1.msra.mxu0 %v1822
    %1874 = vmatprep.subr.mxu0 0.0
    %1875 = vmatpush1.msra.mxu0 %v1823
    %1876 = vmatprep.subr.mxu0 0.0
    %1877 = vmatpush1.msra.mxu0 %v1824
    %1878 = vmatprep.subr.mxu0 0.0
    %1879 = vmatpush1.msra.mxu0 %v1825
    %1880 = vmatprep.subr.mxu0 0.0
    %1881 = vmatpush1.msra.mxu0 %v1826
    %1882 = vmatprep.subr.mxu0 0.0
    %1883 = vmatpush1.msra.mxu0 %v1827
    %1884 = vmatprep.subr.mxu0 0.0
    %1885 = vmatpush1.msra.mxu0 %v1828
    %1886 = vmatprep.subr.mxu0 0.0
    %1887 = vmatpush1.msra.mxu0 %v1829
    %1888 = vmatprep.subr.mxu0 0.0
    %1889 = vmatpush1.msra.mxu0 %v1830
    %1890 = vmatprep.subr.mxu0 0.0
    %1891 = vmatpush1.msra.mxu0 %v1831
    %1892 = vmatprep.subr.mxu0 0.0
    %1893 = vmatpush1.msra.mxu0 %v1832
    %1894 = vmatprep.subr.mxu0 0.0
    %1895 = vmatpush1.msra.mxu0 %v1833
    %1896 = vmatprep.subr.mxu0 0.0
    %1897 = vmatpush1.msra.mxu0 %v1834
    %1898 = vmatprep.subr.mxu0 0.0
    %1899 = vmatpush1.msra.mxu0 %v1835
    %1900 = vmatprep.subr.mxu0 0.0
    %1901 = vmatpush1.msra.mxu0 %v1836
    %1902 = vmatprep.subr.mxu0 0.0
    %1903 = vmatpush1.msra.mxu0 %v1837
    %1904 = vmatprep.subr.mxu0 0.0
    %1905 = vmatpush1.msra.mxu0 %v1838
    %1906 = vmatprep.subr.mxu0 0.0
    %1907 = vmatpush1.msra.mxu0 %v1839
    %1908 = vmatprep.subr.mxu0 0.0
    %1909 = vmatpush1.msra.mxu0 %v1840
    %1910 = vmatprep.subr.mxu0 0.0
    %1911 = vmatpush1.msra.mxu0 %v1841
    %1912 = vmatprep.subr.mxu0 0.0
    %1913 = vmatpush1.msra.mxu0 %v1842
    %1914 = vmatprep.mubr.f32.mxu0 %v1810
    %1915 = vmatmul.mubr.f32.gmra.mrb[0].mxu0 %v1807
    %v1916 = vpop.f32.mrb[0].mxu0
    %v1917 = vadd.f32 %v1848, %v1916
    %v1918 = vpop.f32.mrb[0].mxu0
    %1919 = vdwg.mxu0
    %1920 = vst [vmem:[#allocation8] sm:$0x3] %v1917
    // Predicated region
    $region34: #{tpu_custom_call.1} parent=1 // pred_check
      _
    $region35: #{tpu_custom_call.1} parent=1 // pred_check_branch
      %1922 = sbr.rel (0) target = $region37
    $region36: #{tpu_custom_call.1} parent=1 // pred_region
      %s1924 = ssub.s32 32, 32
      %1925 = vsyncadd [#allocation4], %s1924
      %s1927 = sshll.u32 [#allocation8], 4
      %s1928 = int_to_ptr.vmem [resolvable:$true] %s1927
      %1930 = dma.vmem_to_hbm [thread:$0]  %s1928, 32, %s5, [#allocation4]
    $region37: #{tpu_custom_call.1} parent=1 // pred_fallthru
      _
    // Predicated region
    $region38: #{tpu_custom_call.1} parent=1 // pred_check
      _
    $region39: #{tpu_custom_call.1} parent=1 // pred_check_branch
      %1932 = sbr.rel (0) target = $region41
    $region40: #{tpu_custom_call.1} parent=1 // pred_region
      %1933 = dma.done [#allocation4], 32
    $region41: #{tpu_custom_call.1} parent=1 // pred_fallthru
      _
    %1934 = vsyncpa [#allocation3], 1
    %1935 = vsyncpa [#allocation6], 1
    %1936 = vsyncpa [#allocation4], 1

</llo_original>
